<compile_context>
chip_gen: v7x
topology: tpu7x:2x2x1
jax: 0.10.0
libtpu: 0.0.40
codegen_flags: <defaults>
</compile_context>

<pallas_src>
import functools
import math

import jax
import jax.numpy as jnp
from jax.experimental import pallas as pl
from jax.experimental.pallas import tpu as pltpu


def transformer_blocks_kernel(x_ref,
                              wq_ref, wk_ref, wv_ref, bq_ref, bk_ref, bv_ref,
                              wo_ref, bo_ref,
                              w1_ref, b1_ref, w2_ref, b2_ref,
                              g1_ref, be1_ref, g3_ref, be3_ref,
                              o_ref, *, nhead, eps, num_layers):
    Bt, S, D = x_ref.shape
    R = Bt * S                                   # folded rows for all matmuls
    hd = D // nhead
    scale = jnp.float32(1.0 / math.sqrt(hd))

    # Fold the batch tile into matmul rows: (Bt, S, D) -> (R, D).
    # Leading-dim merge (S == 8 == sublane tile) => free reshape.
    x0 = x_ref[...].reshape(R, D).astype(jnp.float32)

    # Additive causal mask, hoisted out of the head & layer loops. Large finite
    # negative (not -inf) so a fully-masked / padded row cannot produce NaNs.
    rows_i = jax.lax.broadcasted_iota(jnp.int32, (1, S, S), 1)
    cols_i = jax.lax.broadcasted_iota(jnp.int32, (1, S, S), 2)
    causal_bias = jnp.where(cols_i > rows_i,
                            jnp.float32(-1e30), jnp.float32(0.0))

    # Small biases / LN affine params: broadcast ONCE to full row shape outside the
    # layer loop (JAX does not CSE broadcast_in_dim). The big weight matrices are
    # deliberately NOT hoisted -- they are re-read from their VMEM-resident refs
    # inside layer_fn to keep vreg pressure low (VMEM loads are cheap).
    bq = jnp.broadcast_to(bq_ref[...], (R, D))
    bk = jnp.broadcast_to(bk_ref[...], (R, D))
    bv = jnp.broadcast_to(bv_ref[...], (R, D))
    bo = jnp.broadcast_to(bo_ref[...], (R, D))
    b1 = jnp.broadcast_to(b1_ref[...], (R, b1_ref.shape[-1]))
    b2 = jnp.broadcast_to(b2_ref[...], (R, D))
    g1 = jnp.broadcast_to(g1_ref[...], (R, D))
    be1 = jnp.broadcast_to(be1_ref[...], (R, D))
    g3 = jnp.broadcast_to(g3_ref[...], (R, D))
    be3 = jnp.broadcast_to(be3_ref[...], (R, D))

    def layer_norm(t, gamma, beta):                      # all f32
        mu = jnp.mean(t, axis=-1, keepdims=True)
        var = jnp.mean(jnp.square(t - mu), axis=-1, keepdims=True)
        return (t - mu) * jax.lax.rsqrt(var + eps) * gamma + beta

    def layer_fn(_, x):                                  # x: (R, D) f32
        xb = x.astype(jnp.bfloat16)

        # ---- QKV projections on the full (R, D) slab (bf16 MXU, f32 accum) ----
        q = jnp.dot(xb, wq_ref[...], preferred_element_type=jnp.float32) + bq
        k = jnp.dot(xb, wk_ref[...], preferred_element_type=jnp.float32) + bk
        v = jnp.dot(xb, wv_ref[...], preferred_element_type=jnp.float32) + bv

        # Per-sequence view (free leading-dim split).
        q3 = (q * scale).astype(jnp.bfloat16).reshape(Bt, S, D)
        k3 = k.astype(jnp.bfloat16).reshape(Bt, S, D)
        v3 = v.astype(jnp.bfloat16).reshape(Bt, S, D)

        # ---- causal multi-head self-attention, batched over the Bt sequences ----
        # TODO(synk): fold heads into the dot_general batch dim (head-major
        #             relayout) and flash-tile over kv for large S.
        head_outs = []
        for h in range(nhead):                            # static unroll
            sl = slice(h * hd, (h + 1) * hd)
            s = jnp.einsum('bqd,bkd->bqk', q3[:, :, sl], k3[:, :, sl],
                           preferred_element_type=jnp.float32)     # (Bt,S,S) f32
            s = s + causal_bias
            s = s - jnp.max(s, axis=-1, keepdims=True)
            p = jnp.exp(s)
            p = p / jnp.sum(p, axis=-1, keepdims=True)             # exact softmax
            head_outs.append(
                jnp.einsum('bqk,bkd->bqd', p.astype(jnp.bfloat16), v3[:, :, sl],
                           preferred_element_type=jnp.float32))    # (Bt,S,hd)

        attn = jnp.concatenate(head_outs, axis=-1).reshape(R, D)   # (R, D) f32
        # Single (R,D)@(D,D) output projection (no per-head accumulate).
        attn = jnp.dot(attn.astype(jnp.bfloat16), wo_ref[...],
                       preferred_element_type=jnp.float32) + bo

        # ---- residual + LayerNorm 1 (f32) ----
        y = layer_norm(x + attn, g1, be1)

        # ---- ReLU feed-forward on the full (R, .) slab ----
        # TODO(synk): chunk over F for large dim_feedforward (v7x: 64 MiB VMEM).
        h1 = jnp.maximum(
            jnp.dot(y.astype(jnp.bfloat16), w1_ref[...],
                    preferred_element_type=jnp.float32) + b1, 0.0)
        ff = jnp.dot(h1.astype(jnp.bfloat16), w2_ref[...],
                     preferred_element_type=jnp.float32) + b2

        # ---- residual + LayerNorm 3 (f32) ----
        return layer_norm(y + ff, g3, be3)

    out = jax.lax.fori_loop(0, num_layers, layer_fn, x0)
    # TODO(synk): present a lane-dense (Bt, S*D) output slab when D < 128 to avoid
    #             masked partial stores.
    o_ref[...] = out.reshape(Bt, S, D).astype(o_ref.dtype)


def _pick_batch_tile(B, S, target_rows=128):
    """Largest divisor of B such that Bt*S is close to (<=) ~target_rows."""
    bt = max(1, min(B, max(1, target_rows // S)))
    while B % bt != 0:
        bt -= 1
    return bt


def make_blocks_call(B, S, D, F, nhead, eps, num_layers):
    Bt = _pick_batch_tile(B, S)
    kernel = functools.partial(transformer_blocks_kernel,
                               nhead=nhead, eps=eps, num_layers=num_layers)
    # Whole-array, non-pipelined, single-buffered VMEM residency for all
    # weights/biases (they are tiny at these shapes and shared across layers).
    wspec = pl.BlockSpec(memory_space=pltpu.MemorySpace.VMEM)
    return pl.pallas_call(
        kernel,
        out_shape=jax.ShapeDtypeStruct((B, S, D), jnp.float32),
        grid=(B // Bt,),
        in_specs=[pl.BlockSpec((Bt, S, D), lambda b: (b, 0, 0))] + [wspec] * 16,
        out_specs=pl.BlockSpec((Bt, S, D), lambda b: (b, 0, 0)),
        compiler_params=pltpu.CompilerParams(
            dimension_semantics=("parallel",),   # batch-tile axis -> 2 TCs on v7x
            vmem_limit_bytes=32 * 1024 * 1024,
        ),
    )


def init_params(key, D, F):
    # PyTorch convention: Linear weight is (out_features, in_features).
    ks = jax.random.split(key, 6)
    scale = 0.02
    return dict(
        in_w=jax.random.normal(ks[0], (3 * D, D), jnp.float32) * scale,
        in_b=jax.random.normal(ks[1], (1, 3 * D), jnp.float32) * scale,
        out_w=jax.random.normal(ks[2], (D, D), jnp.float32) * scale,
        out_b=jnp.zeros((1, D), jnp.float32),
        w1=jax.random.normal(ks[3], (F, D), jnp.float32) * scale,
        b1=jax.random.normal(ks[4], (1, F), jnp.float32) * scale,
        w2=jax.random.normal(ks[5], (D, F), jnp.float32) * scale,
        b2=jnp.zeros((1, D), jnp.float32),
        g1=jnp.ones((1, D), jnp.float32),
        be1=jnp.zeros((1, D), jnp.float32),
        g3=jnp.ones((1, D), jnp.float32),
        be3=jnp.zeros((1, D), jnp.float32),
    )


def transformer_blocks_forward(x, params, num_layers, nhead, eps=1e-5):
    # Layers are deepcopies in the PyTorch module (identical params), so the same
    # parameter set is applied num_layers times; the layer loop is fused in-kernel.
    # Dropout p == 0 => identity (not implemented).
    B, S, D = x.shape
    F = params["w1"].shape[0]

    # Host-side prep (once): transpose to (in_features, out_features), split the
    # fused in_proj into separate Q/K/V, and cast weight matrices to bf16 for the
    # MXU. Biases / LN params stay f32.
    in_wT = params["in_w"].T.astype(jnp.bfloat16)                 # (D, 3D)
    wqT, wkT, wvT = in_wT[:, :D], in_wT[:, D:2 * D], in_wT[:, 2 * D:]
    in_b = params["in_b"]
    bq, bk, bv = in_b[:, :D], in_b[:, D:2 * D], in_b[:, 2 * D:]
    out_wT = params["out_w"].T.astype(jnp.bfloat16)               # (D, D)
    w1T = params["w1"].T.astype(jnp.bfloat16)                     # (D, F)
    w2T = params["w2"].T.astype(jnp.bfloat16)                     # (F, D)

    call = make_blocks_call(B, S, D, F, nhead, eps, num_layers)
    return call(x.astype(jnp.float32),
                wqT, wkT, wvT, bq, bk, bv,
                out_wT, params["out_b"],
                w1T, params["b1"], w2T, params["b2"],
                params["g1"], params["be1"], params["g3"], params["be3"])


# ---- pure-JAX f32 reference (sanity check only) ----
def _reference(x, p, num_layers, nhead, eps=1e-5):
    B, S, D = x.shape
    hd = D // nhead
    row = jnp.arange(S)[:, None]
    col = jnp.arange(S)[None, :]
    for _ in range(num_layers):
        qkv = x @ p["in_w"].T + p["in_b"]
        q, k, v = qkv[..., :D], qkv[..., D:2 * D], qkv[..., 2 * D:]
        q = q.reshape(B, S, nhead, hd).transpose(0, 2, 1, 3)
        k = k.reshape(B, S, nhead, hd).transpose(0, 2, 1, 3)
        v = v.reshape(B, S, nhead, hd).transpose(0, 2, 1, 3)
        s = jnp.einsum("bhqd,bhkd->bhqk", q, k) / jnp.sqrt(hd)
        s = jnp.where(col > row, -jnp.inf, s)
        pattn = jax.nn.softmax(s, axis=-1)
        a = jnp.einsum("bhqk,bhkd->bhqd", pattn, v).transpose(0, 2, 1, 3).reshape(B, S, D)
        a = a @ p["out_w"].T + p["out_b"]
        y = x + a
        mu = y.mean(-1, keepdims=True)
        var = ((y - mu) ** 2).mean(-1, keepdims=True)
        y = (y - mu) / jnp.sqrt(var + eps) * p["g1"] + p["be1"]
        ff = jnp.maximum(y @ p["w1"].T + p["b1"], 0.0) @ p["w2"].T + p["b2"]
        z = y + ff
        mu2 = z.mean(-1, keepdims=True)
        var2 = ((z - mu2) ** 2).mean(-1, keepdims=True)
        x = (z - mu2) / jnp.sqrt(var2 + eps) * p["g3"] + p["be3"]
    return x


if __name__ == "__main__":
    num_layers = 2
    B, S, D, nhead, F = 2, 8, 32, 4, 64

    key = jax.random.PRNGKey(0)
    kx, kp = jax.random.split(key)
    x = jax.random.normal(kx, (B, S, D), jnp.float32)
    params = init_params(kp, D, F)

    out = transformer_blocks_forward(x, params, num_layers, nhead)
    out = jax.block_until_ready(out)

    ref = _reference(x, params, num_layers, nhead)
    assert out.shape == (B, S, D)
    assert bool(jnp.all(jnp.isfinite(out)))
    # bf16 matmul operands vs. f32 reference: allow a correspondingly looser
    # tolerance (output is LayerNormed / unit scale, so structural bugs are O(1)).
    max_err = float(jnp.max(jnp.abs(out - ref)))
    assert max_err < 2e-2, f"mismatch vs reference: {max_err}"

    print("KERNEL_OK")
</pallas_src>

<mosaic_0001>
module attributes {stable_mosaic.version = 11 : i64} {
  func.func @transformer_blocks_kernel(%arg0: i32, %arg1: memref<2x8x32xf32, #tpu.memory_space<vmem>>, %arg2: memref<32x32xbf16, #tpu.memory_space<vmem>>, %arg3: memref<32x32xbf16, #tpu.memory_space<vmem>>, %arg4: memref<32x32xbf16, #tpu.memory_space<vmem>>, %arg5: memref<1x32xf32, #tpu.memory_space<vmem>>, %arg6: memref<1x32xf32, #tpu.memory_space<vmem>>, %arg7: memref<1x32xf32, #tpu.memory_space<vmem>>, %arg8: memref<32x32xbf16, #tpu.memory_space<vmem>>, %arg9: memref<1x32xf32, #tpu.memory_space<vmem>>, %arg10: memref<32x64xbf16, #tpu.memory_space<vmem>>, %arg11: memref<1x64xf32, #tpu.memory_space<vmem>>, %arg12: memref<64x32xbf16, #tpu.memory_space<vmem>>, %arg13: memref<1x32xf32, #tpu.memory_space<vmem>>, %arg14: memref<1x32xf32, #tpu.memory_space<vmem>>, %arg15: memref<1x32xf32, #tpu.memory_space<vmem>>, %arg16: memref<1x32xf32, #tpu.memory_space<vmem>>, %arg17: memref<1x32xf32, #tpu.memory_space<vmem>>, %arg18: memref<2x8x32xf32, #tpu.memory_space<vmem>>) attributes {dimension_semantics = [#tpu.dimension_semantics<parallel>], iteration_bounds = array<i64: 1>, scalar_prefetch = 0 : i64, scratch_operands = 0 : i64, tpu.core_type = #tpu.core_type<tc>, window_params = [{transform_indices = @transform_0, window_bounds = array<i64: 2, 8, 32>}, {pipeline_mode = #tpu.pipeline_mode<synchronous>, transform_indices = @transform_1, window_bounds = array<i64: 32, 32>}, {pipeline_mode = #tpu.pipeline_mode<synchronous>, transform_indices = @transform_2, window_bounds = array<i64: 32, 32>}, {pipeline_mode = #tpu.pipeline_mode<synchronous>, transform_indices = @transform_3, window_bounds = array<i64: 32, 32>}, {pipeline_mode = #tpu.pipeline_mode<synchronous>, transform_indices = @transform_4, window_bounds = array<i64: 1, 32>}, {pipeline_mode = #tpu.pipeline_mode<synchronous>, transform_indices = @transform_5, window_bounds = array<i64: 1, 32>}, {pipeline_mode = #tpu.pipeline_mode<synchronous>, transform_indices = @transform_6, window_bounds = array<i64: 1, 32>}, {pipeline_mode = #tpu.pipeline_mode<synchronous>, transform_indices = @transform_7, window_bounds = array<i64: 32, 32>}, {pipeline_mode = #tpu.pipeline_mode<synchronous>, transform_indices = @transform_8, window_bounds = array<i64: 1, 32>}, {pipeline_mode = #tpu.pipeline_mode<synchronous>, transform_indices = @transform_9, window_bounds = array<i64: 32, 64>}, {pipeline_mode = #tpu.pipeline_mode<synchronous>, transform_indices = @transform_10, window_bounds = array<i64: 1, 64>}, {pipeline_mode = #tpu.pipeline_mode<synchronous>, transform_indices = @transform_11, window_bounds = array<i64: 64, 32>}, {pipeline_mode = #tpu.pipeline_mode<synchronous>, transform_indices = @transform_12, window_bounds = array<i64: 1, 32>}, {pipeline_mode = #tpu.pipeline_mode<synchronous>, transform_indices = @transform_13, window_bounds = array<i64: 1, 32>}, {pipeline_mode = #tpu.pipeline_mode<synchronous>, transform_indices = @transform_14, window_bounds = array<i64: 1, 32>}, {pipeline_mode = #tpu.pipeline_mode<synchronous>, transform_indices = @transform_15, window_bounds = array<i64: 1, 32>}, {pipeline_mode = #tpu.pipeline_mode<synchronous>, transform_indices = @transform_16, window_bounds = array<i64: 1, 32>}, {transform_indices = @transform_17, window_bounds = array<i64: 2, 8, 32>}]} {
    %c0 = arith.constant 0 : index
    %c0_0 = arith.constant 0 : index
    %c0_1 = arith.constant 0 : index
    %0 = vector.load %arg1[%c0, %c0_0, %c0_1] : memref<2x8x32xf32, #tpu.memory_space<vmem>>, vector<2x8x32xf32>
    %1 = vector.shape_cast %0 : vector<2x8x32xf32> to vector<16x32xf32>
    %2 = tpu.iota {dimensions = array<i32: 1>} : vector<1x8x8xi32>
    %3 = tpu.iota {dimensions = array<i32: 2>} : vector<1x8x8xi32>
    %4 = arith.cmpi sgt, %3, %2 : vector<1x8x8xi32>
    %cst = arith.constant -1.000000e+30 : f32
    %cst_2 = arith.constant 0.000000e+00 : f32
    %5 = vector.broadcast %cst : f32 to vector<1x8x8xf32>
    %6 = vector.broadcast %cst_2 : f32 to vector<1x8x8xf32>
    %7 = arith.select %4, %5, %6 : vector<1x8x8xi1>, vector<1x8x8xf32>
    %c0_3 = arith.constant 0 : index
    %c0_4 = arith.constant 0 : index
    %8 = vector.load %arg5[%c0_3, %c0_4] : memref<1x32xf32, #tpu.memory_space<vmem>>, vector<1x32xf32>
    %9 = vector.shape_cast %8 : vector<1x32xf32> to vector<1x32xf32>
    %10 = vector.broadcast %9 : vector<1x32xf32> to vector<16x32xf32>
    %c0_5 = arith.constant 0 : index
    %c0_6 = arith.constant 0 : index
    %11 = vector.load %arg6[%c0_5, %c0_6] : memref<1x32xf32, #tpu.memory_space<vmem>>, vector<1x32xf32>
    %12 = vector.shape_cast %11 : vector<1x32xf32> to vector<1x32xf32>
    %13 = vector.broadcast %12 : vector<1x32xf32> to vector<16x32xf32>
    %c0_7 = arith.constant 0 : index
    %c0_8 = arith.constant 0 : index
    %14 = vector.load %arg7[%c0_7, %c0_8] : memref<1x32xf32, #tpu.memory_space<vmem>>, vector<1x32xf32>
    %15 = vector.shape_cast %14 : vector<1x32xf32> to vector<1x32xf32>
    %16 = vector.broadcast %15 : vector<1x32xf32> to vector<16x32xf32>
    %c0_9 = arith.constant 0 : index
    %c0_10 = arith.constant 0 : index
    %17 = vector.load %arg9[%c0_9, %c0_10] : memref<1x32xf32, #tpu.memory_space<vmem>>, vector<1x32xf32>
    %18 = vector.shape_cast %17 : vector<1x32xf32> to vector<1x32xf32>
    %19 = vector.broadcast %18 : vector<1x32xf32> to vector<16x32xf32>
    %c0_11 = arith.constant 0 : index
    %c0_12 = arith.constant 0 : index
    %20 = vector.load %arg11[%c0_11, %c0_12] : memref<1x64xf32, #tpu.memory_space<vmem>>, vector<1x64xf32>
    %21 = vector.shape_cast %20 : vector<1x64xf32> to vector<1x64xf32>
    %22 = vector.broadcast %21 : vector<1x64xf32> to vector<16x64xf32>
    %c0_13 = arith.constant 0 : index
    %c0_14 = arith.constant 0 : index
    %23 = vector.load %arg13[%c0_13, %c0_14] : memref<1x32xf32, #tpu.memory_space<vmem>>, vector<1x32xf32>
    %24 = vector.shape_cast %23 : vector<1x32xf32> to vector<1x32xf32>
    %25 = vector.broadcast %24 : vector<1x32xf32> to vector<16x32xf32>
    %c0_15 = arith.constant 0 : index
    %c0_16 = arith.constant 0 : index
    %26 = vector.load %arg14[%c0_15, %c0_16] : memref<1x32xf32, #tpu.memory_space<vmem>>, vector<1x32xf32>
    %27 = vector.shape_cast %26 : vector<1x32xf32> to vector<1x32xf32>
    %28 = vector.broadcast %27 : vector<1x32xf32> to vector<16x32xf32>
    %c0_17 = arith.constant 0 : index
    %c0_18 = arith.constant 0 : index
    %29 = vector.load %arg15[%c0_17, %c0_18] : memref<1x32xf32, #tpu.memory_space<vmem>>, vector<1x32xf32>
    %30 = vector.shape_cast %29 : vector<1x32xf32> to vector<1x32xf32>
    %31 = vector.broadcast %30 : vector<1x32xf32> to vector<16x32xf32>
    %c0_19 = arith.constant 0 : index
    %c0_20 = arith.constant 0 : index
    %32 = vector.load %arg16[%c0_19, %c0_20] : memref<1x32xf32, #tpu.memory_space<vmem>>, vector<1x32xf32>
    %33 = vector.shape_cast %32 : vector<1x32xf32> to vector<1x32xf32>
    %34 = vector.broadcast %33 : vector<1x32xf32> to vector<16x32xf32>
    %c0_21 = arith.constant 0 : index
    %c0_22 = arith.constant 0 : index
    %35 = vector.load %arg17[%c0_21, %c0_22] : memref<1x32xf32, #tpu.memory_space<vmem>>, vector<1x32xf32>
    %36 = vector.shape_cast %35 : vector<1x32xf32> to vector<1x32xf32>
    %37 = vector.broadcast %36 : vector<1x32xf32> to vector<16x32xf32>
    %cst_23 = arith.constant 0.353553385 : f32
    %c0_i32 = arith.constant 0 : i32
    %c2_i32 = arith.constant 2 : i32
    %38 = arith.addi %c0_i32, %c2_i32 : i32
    %c1_i32 = arith.constant 1 : i32
    %39 = scf.for %arg19 = %c0_i32 to %38 step %c1_i32 iter_args(%arg20 = %1) -> (vector<16x32xf32>)  : i32 {
      %42 = arith.truncf %arg20 : vector<16x32xf32> to vector<16x32xbf16>
      %c0_27 = arith.constant 0 : index
      %c0_28 = arith.constant 0 : index
      %43 = vector.load %arg2[%c0_27, %c0_28] : memref<32x32xbf16, #tpu.memory_space<vmem>>, vector<32x32xbf16>
      %cst_29 = arith.constant dense<0.000000e+00> : vector<16x32xf32>
      %44 = tpu.matmul %42, %43, %cst_29 {dimension_numbers = #tpu.dot_dimension_numbers<[1], [0], [0], [1], [0, 0, 1, 1], [], []>} : vector<16x32xbf16>, vector<32x32xbf16>, vector<16x32xf32> -> vector<16x32xf32>
      %45 = arith.addf %44, %10 : vector<16x32xf32>
      %c0_30 = arith.constant 0 : index
      %c0_31 = arith.constant 0 : index
      %46 = vector.load %arg3[%c0_30, %c0_31] : memref<32x32xbf16, #tpu.memory_space<vmem>>, vector<32x32xbf16>
      %cst_32 = arith.constant dense<0.000000e+00> : vector<16x32xf32>
      %47 = tpu.matmul %42, %46, %cst_32 {dimension_numbers = #tpu.dot_dimension_numbers<[1], [0], [0], [1], [0, 0, 1, 1], [], []>} : vector<16x32xbf16>, vector<32x32xbf16>, vector<16x32xf32> -> vector<16x32xf32>
      %48 = arith.addf %47, %13 : vector<16x32xf32>
      %c0_33 = arith.constant 0 : index
      %c0_34 = arith.constant 0 : index
      %49 = vector.load %arg4[%c0_33, %c0_34] : memref<32x32xbf16, #tpu.memory_space<vmem>>, vector<32x32xbf16>
      %cst_35 = arith.constant dense<0.000000e+00> : vector<16x32xf32>
      %50 = tpu.matmul %42, %49, %cst_35 {dimension_numbers = #tpu.dot_dimension_numbers<[1], [0], [0], [1], [0, 0, 1, 1], [], []>} : vector<16x32xbf16>, vector<32x32xbf16>, vector<16x32xf32> -> vector<16x32xf32>
      %51 = arith.addf %50, %16 : vector<16x32xf32>
      %52 = vector.broadcast %cst_23 : f32 to vector<16x32xf32>
      %53 = arith.mulf %45, %52 : vector<16x32xf32>
      %54 = arith.truncf %53 : vector<16x32xf32> to vector<16x32xbf16>
      %55 = vector.shape_cast %54 : vector<16x32xbf16> to vector<2x8x32xbf16>
      %56 = arith.truncf %48 : vector<16x32xf32> to vector<16x32xbf16>
      %57 = vector.shape_cast %56 : vector<16x32xbf16> to vector<2x8x32xbf16>
      %58 = arith.truncf %51 : vector<16x32xf32> to vector<16x32xbf16>
      %59 = vector.shape_cast %58 : vector<16x32xbf16> to vector<2x8x32xbf16>
      %60 = vector.extract_strided_slice %55 {offsets = [0, 0, 0], sizes = [2, 8, 8], strides = [1, 1, 1]} : vector<2x8x32xbf16> to vector<2x8x8xbf16>
      %61 = vector.extract_strided_slice %57 {offsets = [0, 0, 0], sizes = [2, 8, 8], strides = [1, 1, 1]} : vector<2x8x32xbf16> to vector<2x8x8xbf16>
      "tpu.trace_start"() <{level = 10 : i32, message = "bqd,bkd->bqk"}> : () -> ()
      %cst_36 = arith.constant dense<0.000000e+00> : vector<2x8x8xf32>
      %62 = tpu.matmul %60, %61, %cst_36 {dimension_numbers = #tpu.dot_dimension_numbers<[2], [2], [1], [1], [0, 0, 0, 1, 1, 1], [0], [0]>} : vector<2x8x8xbf16>, vector<2x8x8xbf16>, vector<2x8x8xf32> -> vector<2x8x8xf32>
      "tpu.trace_stop"() : () -> ()
      %63 = vector.broadcast %7 : vector<1x8x8xf32> to vector<2x8x8xf32>
      %64 = arith.addf %62, %63 : vector<2x8x8xf32>
      %cst_37 = arith.constant dense<0xFF800000> : vector<2x8xf32>
      %65 = vector.multi_reduction <maximumf>, %64, %cst_37 [2] : vector<2x8x8xf32> to vector<2x8xf32>
      %66 = vector.shape_cast %65 : vector<2x8xf32> to vector<2x8x1xf32>
      %67 = vector.broadcast %66 : vector<2x8x1xf32> to vector<2x8x8xf32>
      %68 = arith.subf %64, %67 : vector<2x8x8xf32>
      %69 = math.exp %68 : vector<2x8x8xf32>
      %cst_38 = arith.constant dense<0.000000e+00> : vector<2x8xf32>
      %70 = vector.multi_reduction <add>, %69, %cst_38 [2] : vector<2x8x8xf32> to vector<2x8xf32>
      %71 = vector.shape_cast %70 : vector<2x8xf32> to vector<2x8x1xf32>
      %72 = vector.broadcast %71 : vector<2x8x1xf32> to vector<2x8x8xf32>
      %73 = arith.divf %69, %72 : vector<2x8x8xf32>
      %74 = arith.truncf %73 : vector<2x8x8xf32> to vector<2x8x8xbf16>
      %75 = vector.extract_strided_slice %59 {offsets = [0, 0, 0], sizes = [2, 8, 8], strides = [1, 1, 1]} : vector<2x8x32xbf16> to vector<2x8x8xbf16>
      "tpu.trace_start"() <{level = 10 : i32, message = "bqk,bkd->bqd"}> : () -> ()
      %cst_39 = arith.constant dense<0.000000e+00> : vector<2x8x8xf32>
      %76 = tpu.matmul %74, %75, %cst_39 {dimension_numbers = #tpu.dot_dimension_numbers<[2], [1], [1], [2], [0, 0, 0, 1, 1, 2], [0], [0]>} : vector<2x8x8xbf16>, vector<2x8x8xbf16>, vector<2x8x8xf32> -> vector<2x8x8xf32>
      "tpu.trace_stop"() : () -> ()
      %77 = vector.extract_strided_slice %55 {offsets = [0, 0, 8], sizes = [2, 8, 8], strides = [1, 1, 1]} : vector<2x8x32xbf16> to vector<2x8x8xbf16>
      %78 = vector.extract_strided_slice %57 {offsets = [0, 0, 8], sizes = [2, 8, 8], strides = [1, 1, 1]} : vector<2x8x32xbf16> to vector<2x8x8xbf16>
      "tpu.trace_start"() <{level = 10 : i32, message = "bqd,bkd->bqk"}> : () -> ()
      %cst_40 = arith.constant dense<0.000000e+00> : vector<2x8x8xf32>
      %79 = tpu.matmul %77, %78, %cst_40 {dimension_numbers = #tpu.dot_dimension_numbers<[2], [2], [1], [1], [0, 0, 0, 1, 1, 1], [0], [0]>} : vector<2x8x8xbf16>, vector<2x8x8xbf16>, vector<2x8x8xf32> -> vector<2x8x8xf32>
      "tpu.trace_stop"() : () -> ()
      %80 = vector.broadcast %7 : vector<1x8x8xf32> to vector<2x8x8xf32>
      %81 = arith.addf %79, %80 : vector<2x8x8xf32>
      %cst_41 = arith.constant dense<0xFF800000> : vector<2x8xf32>
      %82 = vector.multi_reduction <maximumf>, %81, %cst_41 [2] : vector<2x8x8xf32> to vector<2x8xf32>
      %83 = vector.shape_cast %82 : vector<2x8xf32> to vector<2x8x1xf32>
      %84 = vector.broadcast %83 : vector<2x8x1xf32> to vector<2x8x8xf32>
      %85 = arith.subf %81, %84 : vector<2x8x8xf32>
      %86 = math.exp %85 : vector<2x8x8xf32>
      %cst_42 = arith.constant dense<0.000000e+00> : vector<2x8xf32>
      %87 = vector.multi_reduction <add>, %86, %cst_42 [2] : vector<2x8x8xf32> to vector<2x8xf32>
      %88 = vector.shape_cast %87 : vector<2x8xf32> to vector<2x8x1xf32>
      %89 = vector.broadcast %88 : vector<2x8x1xf32> to vector<2x8x8xf32>
      %90 = arith.divf %86, %89 : vector<2x8x8xf32>
      %91 = arith.truncf %90 : vector<2x8x8xf32> to vector<2x8x8xbf16>
      %92 = vector.extract_strided_slice %59 {offsets = [0, 0, 8], sizes = [2, 8, 8], strides = [1, 1, 1]} : vector<2x8x32xbf16> to vector<2x8x8xbf16>
      "tpu.trace_start"() <{level = 10 : i32, message = "bqk,bkd->bqd"}> : () -> ()
      %cst_43 = arith.constant dense<0.000000e+00> : vector<2x8x8xf32>
      %93 = tpu.matmul %91, %92, %cst_43 {dimension_numbers = #tpu.dot_dimension_numbers<[2], [1], [1], [2], [0, 0, 0, 1, 1, 2], [0], [0]>} : vector<2x8x8xbf16>, vector<2x8x8xbf16>, vector<2x8x8xf32> -> vector<2x8x8xf32>
      "tpu.trace_stop"() : () -> ()
      %94 = vector.extract_strided_slice %55 {offsets = [0, 0, 16], sizes = [2, 8, 8], strides = [1, 1, 1]} : vector<2x8x32xbf16> to vector<2x8x8xbf16>
      %95 = vector.extract_strided_slice %57 {offsets = [0, 0, 16], sizes = [2, 8, 8], strides = [1, 1, 1]} : vector<2x8x32xbf16> to vector<2x8x8xbf16>
      "tpu.trace_start"() <{level = 10 : i32, message = "bqd,bkd->bqk"}> : () -> ()
      %cst_44 = arith.constant dense<0.000000e+00> : vector<2x8x8xf32>
      %96 = tpu.matmul %94, %95, %cst_44 {dimension_numbers = #tpu.dot_dimension_numbers<[2], [2], [1], [1], [0, 0, 0, 1, 1, 1], [0], [0]>} : vector<2x8x8xbf16>, vector<2x8x8xbf16>, vector<2x8x8xf32> -> vector<2x8x8xf32>
      "tpu.trace_stop"() : () -> ()
      %97 = vector.broadcast %7 : vector<1x8x8xf32> to vector<2x8x8xf32>
      %98 = arith.addf %96, %97 : vector<2x8x8xf32>
      %cst_45 = arith.constant dense<0xFF800000> : vector<2x8xf32>
      %99 = vector.multi_reduction <maximumf>, %98, %cst_45 [2] : vector<2x8x8xf32> to vector<2x8xf32>
      %100 = vector.shape_cast %99 : vector<2x8xf32> to vector<2x8x1xf32>
      %101 = vector.broadcast %100 : vector<2x8x1xf32> to vector<2x8x8xf32>
      %102 = arith.subf %98, %101 : vector<2x8x8xf32>
      %103 = math.exp %102 : vector<2x8x8xf32>
      %cst_46 = arith.constant dense<0.000000e+00> : vector<2x8xf32>
      %104 = vector.multi_reduction <add>, %103, %cst_46 [2] : vector<2x8x8xf32> to vector<2x8xf32>
      %105 = vector.shape_cast %104 : vector<2x8xf32> to vector<2x8x1xf32>
      %106 = vector.broadcast %105 : vector<2x8x1xf32> to vector<2x8x8xf32>
      %107 = arith.divf %103, %106 : vector<2x8x8xf32>
      %108 = arith.truncf %107 : vector<2x8x8xf32> to vector<2x8x8xbf16>
      %109 = vector.extract_strided_slice %59 {offsets = [0, 0, 16], sizes = [2, 8, 8], strides = [1, 1, 1]} : vector<2x8x32xbf16> to vector<2x8x8xbf16>
      "tpu.trace_start"() <{level = 10 : i32, message = "bqk,bkd->bqd"}> : () -> ()
      %cst_47 = arith.constant dense<0.000000e+00> : vector<2x8x8xf32>
      %110 = tpu.matmul %108, %109, %cst_47 {dimension_numbers = #tpu.dot_dimension_numbers<[2], [1], [1], [2], [0, 0, 0, 1, 1, 2], [0], [0]>} : vector<2x8x8xbf16>, vector<2x8x8xbf16>, vector<2x8x8xf32> -> vector<2x8x8xf32>
      "tpu.trace_stop"() : () -> ()
      %111 = vector.extract_strided_slice %55 {offsets = [0, 0, 24], sizes = [2, 8, 8], strides = [1, 1, 1]} : vector<2x8x32xbf16> to vector<2x8x8xbf16>
      %112 = vector.extract_strided_slice %57 {offsets = [0, 0, 24], sizes = [2, 8, 8], strides = [1, 1, 1]} : vector<2x8x32xbf16> to vector<2x8x8xbf16>
      "tpu.trace_start"() <{level = 10 : i32, message = "bqd,bkd->bqk"}> : () -> ()
      %cst_48 = arith.constant dense<0.000000e+00> : vector<2x8x8xf32>
      %113 = tpu.matmul %111, %112, %cst_48 {dimension_numbers = #tpu.dot_dimension_numbers<[2], [2], [1], [1], [0, 0, 0, 1, 1, 1], [0], [0]>} : vector<2x8x8xbf16>, vector<2x8x8xbf16>, vector<2x8x8xf32> -> vector<2x8x8xf32>
      "tpu.trace_stop"() : () -> ()
      %114 = vector.broadcast %7 : vector<1x8x8xf32> to vector<2x8x8xf32>
      %115 = arith.addf %113, %114 : vector<2x8x8xf32>
      %cst_49 = arith.constant dense<0xFF800000> : vector<2x8xf32>
      %116 = vector.multi_reduction <maximumf>, %115, %cst_49 [2] : vector<2x8x8xf32> to vector<2x8xf32>
      %117 = vector.shape_cast %116 : vector<2x8xf32> to vector<2x8x1xf32>
      %118 = vector.broadcast %117 : vector<2x8x1xf32> to vector<2x8x8xf32>
      %119 = arith.subf %115, %118 : vector<2x8x8xf32>
      %120 = math.exp %119 : vector<2x8x8xf32>
      %cst_50 = arith.constant dense<0.000000e+00> : vector<2x8xf32>
      %121 = vector.multi_reduction <add>, %120, %cst_50 [2] : vector<2x8x8xf32> to vector<2x8xf32>
      %122 = vector.shape_cast %121 : vector<2x8xf32> to vector<2x8x1xf32>
      %123 = vector.broadcast %122 : vector<2x8x1xf32> to vector<2x8x8xf32>
      %124 = arith.divf %120, %123 : vector<2x8x8xf32>
      %125 = arith.truncf %124 : vector<2x8x8xf32> to vector<2x8x8xbf16>
      %126 = vector.extract_strided_slice %59 {offsets = [0, 0, 24], sizes = [2, 8, 8], strides = [1, 1, 1]} : vector<2x8x32xbf16> to vector<2x8x8xbf16>
      "tpu.trace_start"() <{level = 10 : i32, message = "bqk,bkd->bqd"}> : () -> ()
      %cst_51 = arith.constant dense<0.000000e+00> : vector<2x8x8xf32>
      %127 = tpu.matmul %125, %126, %cst_51 {dimension_numbers = #tpu.dot_dimension_numbers<[2], [1], [1], [2], [0, 0, 0, 1, 1, 2], [0], [0]>} : vector<2x8x8xbf16>, vector<2x8x8xbf16>, vector<2x8x8xf32> -> vector<2x8x8xf32>
      "tpu.trace_stop"() : () -> ()
      %128 = tpu.concatenate %76, %93, %110, %127 in 2 : vector<2x8x8xf32>, vector<2x8x8xf32>, vector<2x8x8xf32>, vector<2x8x8xf32> -> vector<2x8x32xf32>
      %129 = vector.shape_cast %128 : vector<2x8x32xf32> to vector<16x32xf32>
      %130 = arith.truncf %129 : vector<16x32xf32> to vector<16x32xbf16>
      %c0_52 = arith.constant 0 : index
      %c0_53 = arith.constant 0 : index
      %131 = vector.load %arg8[%c0_52, %c0_53] : memref<32x32xbf16, #tpu.memory_space<vmem>>, vector<32x32xbf16>
      %cst_54 = arith.constant dense<0.000000e+00> : vector<16x32xf32>
      %132 = tpu.matmul %130, %131, %cst_54 {dimension_numbers = #tpu.dot_dimension_numbers<[1], [0], [0], [1], [0, 0, 1, 1], [], []>} : vector<16x32xbf16>, vector<32x32xbf16>, vector<16x32xf32> -> vector<16x32xf32>
      %133 = arith.addf %132, %19 : vector<16x32xf32>
      %134 = arith.addf %arg20, %133 : vector<16x32xf32>
      %cst_55 = arith.constant dense<0.000000e+00> : vector<16xf32>
      %135 = vector.multi_reduction <add>, %134, %cst_55 [1] : vector<16x32xf32> to vector<16xf32>
      %136 = vector.shape_cast %135 : vector<16xf32> to vector<16x1xf32>
      %cst_56 = arith.constant 3.200000e+01 : f32
      %137 = vector.broadcast %cst_56 : f32 to vector<16x1xf32>
      %138 = arith.divf %136, %137 : vector<16x1xf32>
      %139 = vector.broadcast %138 : vector<16x1xf32> to vector<16x32xf32>
      %140 = arith.subf %134, %139 : vector<16x32xf32>
      %141 = arith.mulf %140, %140 : vector<16x32xf32>
      %cst_57 = arith.constant dense<0.000000e+00> : vector<16xf32>
      %142 = vector.multi_reduction <add>, %141, %cst_57 [1] : vector<16x32xf32> to vector<16xf32>
      %143 = vector.shape_cast %142 : vector<16xf32> to vector<16x1xf32>
      %cst_58 = arith.constant 3.200000e+01 : f32
      %144 = vector.broadcast %cst_58 : f32 to vector<16x1xf32>
      %145 = arith.divf %143, %144 : vector<16x1xf32>
      %146 = vector.broadcast %138 : vector<16x1xf32> to vector<16x32xf32>
      %147 = arith.subf %134, %146 : vector<16x32xf32>
      %cst_59 = arith.constant 9.99999974E-6 : f32
      %148 = vector.broadcast %cst_59 : f32 to vector<16x1xf32>
      %149 = arith.addf %145, %148 : vector<16x1xf32>
      %150 = math.rsqrt %149 : vector<16x1xf32>
      %151 = vector.broadcast %150 : vector<16x1xf32> to vector<16x32xf32>
      %152 = arith.mulf %147, %151 : vector<16x32xf32>
      %153 = arith.mulf %152, %28 : vector<16x32xf32>
      %154 = arith.addf %153, %31 : vector<16x32xf32>
      %155 = arith.truncf %154 : vector<16x32xf32> to vector<16x32xbf16>
      %c0_60 = arith.constant 0 : index
      %c0_61 = arith.constant 0 : index
      %156 = vector.load %arg10[%c0_60, %c0_61] : memref<32x64xbf16, #tpu.memory_space<vmem>>, vector<32x64xbf16>
      %cst_62 = arith.constant dense<0.000000e+00> : vector<16x64xf32>
      %157 = tpu.matmul %155, %156, %cst_62 {dimension_numbers = #tpu.dot_dimension_numbers<[1], [0], [0], [1], [0, 0, 1, 1], [], []>} : vector<16x32xbf16>, vector<32x64xbf16>, vector<16x64xf32> -> vector<16x64xf32>
      %158 = arith.addf %157, %22 : vector<16x64xf32>
      %cst_63 = arith.constant 0.000000e+00 : f32
      %159 = vector.broadcast %cst_63 : f32 to vector<16x64xf32>
      %160 = arith.maximumf %158, %159 : vector<16x64xf32>
      %161 = arith.truncf %160 : vector<16x64xf32> to vector<16x64xbf16>
      %c0_64 = arith.constant 0 : index
      %c0_65 = arith.constant 0 : index
      %162 = vector.load %arg12[%c0_64, %c0_65] : memref<64x32xbf16, #tpu.memory_space<vmem>>, vector<64x32xbf16>
      %cst_66 = arith.constant dense<0.000000e+00> : vector<16x32xf32>
      %163 = tpu.matmul %161, %162, %cst_66 {dimension_numbers = #tpu.dot_dimension_numbers<[1], [0], [0], [1], [0, 0, 1, 1], [], []>} : vector<16x64xbf16>, vector<64x32xbf16>, vector<16x32xf32> -> vector<16x32xf32>
      %164 = arith.addf %163, %25 : vector<16x32xf32>
      %165 = arith.addf %154, %164 : vector<16x32xf32>
      %cst_67 = arith.constant dense<0.000000e+00> : vector<16xf32>
      %166 = vector.multi_reduction <add>, %165, %cst_67 [1] : vector<16x32xf32> to vector<16xf32>
      %167 = vector.shape_cast %166 : vector<16xf32> to vector<16x1xf32>
      %cst_68 = arith.constant 3.200000e+01 : f32
      %168 = vector.broadcast %cst_68 : f32 to vector<16x1xf32>
      %169 = arith.divf %167, %168 : vector<16x1xf32>
      %170 = vector.broadcast %169 : vector<16x1xf32> to vector<16x32xf32>
      %171 = arith.subf %165, %170 : vector<16x32xf32>
      %172 = arith.mulf %171, %171 : vector<16x32xf32>
      %cst_69 = arith.constant dense<0.000000e+00> : vector<16xf32>
      %173 = vector.multi_reduction <add>, %172, %cst_69 [1] : vector<16x32xf32> to vector<16xf32>
      %174 = vector.shape_cast %173 : vector<16xf32> to vector<16x1xf32>
      %cst_70 = arith.constant 3.200000e+01 : f32
      %175 = vector.broadcast %cst_70 : f32 to vector<16x1xf32>
      %176 = arith.divf %174, %175 : vector<16x1xf32>
      %177 = vector.broadcast %169 : vector<16x1xf32> to vector<16x32xf32>
      %178 = arith.subf %165, %177 : vector<16x32xf32>
      %cst_71 = arith.constant 9.99999974E-6 : f32
      %179 = vector.broadcast %cst_71 : f32 to vector<16x1xf32>
      %180 = arith.addf %176, %179 : vector<16x1xf32>
      %181 = math.rsqrt %180 : vector<16x1xf32>
      %182 = vector.broadcast %181 : vector<16x1xf32> to vector<16x32xf32>
      %183 = arith.mulf %178, %182 : vector<16x32xf32>
      %184 = arith.mulf %183, %34 : vector<16x32xf32>
      %185 = arith.addf %184, %37 : vector<16x32xf32>
      scf.yield %185 : vector<16x32xf32>
    }
    %40 = vector.shape_cast %39 : vector<16x32xf32> to vector<2x8x32xf32>
    %c0_24 = arith.constant 0 : index
    %c0_25 = arith.constant 0 : index
    %c0_26 = arith.constant 0 : index
    %41 = vector.load %arg18[%c0_24, %c0_25, %c0_26] : memref<2x8x32xf32, #tpu.memory_space<vmem>>, vector<2x8x32xf32>
    tpu.vector_store %arg18[%c0_24, %c0_25, %c0_26], %40 {strides = array<i32>} : memref<2x8x32xf32, #tpu.memory_space<vmem>>, vector<2x8x32xf32>,
    return
  }
  func.func @transform_0(%arg0: i32) -> (i32, i32, i32) {
    %c0_i32 = arith.constant 0 : i32
    %c0_i32_0 = arith.constant 0 : i32
    %c0_i32_1 = arith.constant 0 : i32
    return %arg0, %c0_i32, %c0_i32_0 : i32, i32, i32
  }
  func.func @transform_1(%arg0: i32) -> (i32, i32) {
    %c0_i32 = arith.constant 0 : i32
    %c0_i32_0 = arith.constant 0 : i32
    %c0_i32_1 = arith.constant 0 : i32
    return %c0_i32, %c0_i32_0 : i32, i32
  }
  func.func @transform_2(%arg0: i32) -> (i32, i32) {
    %c0_i32 = arith.constant 0 : i32
    %c0_i32_0 = arith.constant 0 : i32
    %c0_i32_1 = arith.constant 0 : i32
    return %c0_i32, %c0_i32_0 : i32, i32
  }
  func.func @transform_3(%arg0: i32) -> (i32, i32) {
    %c0_i32 = arith.constant 0 : i32
    %c0_i32_0 = arith.constant 0 : i32
    %c0_i32_1 = arith.constant 0 : i32
    return %c0_i32, %c0_i32_0 : i32, i32
  }
  func.func @transform_4(%arg0: i32) -> (i32, i32) {
    %c0_i32 = arith.constant 0 : i32
    %c0_i32_0 = arith.constant 0 : i32
    %c0_i32_1 = arith.constant 0 : i32
    return %c0_i32, %c0_i32_0 : i32, i32
  }
  func.func @transform_5(%arg0: i32) -> (i32, i32) {
    %c0_i32 = arith.constant 0 : i32
    %c0_i32_0 = arith.constant 0 : i32
    %c0_i32_1 = arith.constant 0 : i32
    return %c0_i32, %c0_i32_0 : i32, i32
  }
  func.func @transform_6(%arg0: i32) -> (i32, i32) {
    %c0_i32 = arith.constant 0 : i32
    %c0_i32_0 = arith.constant 0 : i32
    %c0_i32_1 = arith.constant 0 : i32
    return %c0_i32, %c0_i32_0 : i32, i32
  }
  func.func @transform_7(%arg0: i32) -> (i32, i32) {
    %c0_i32 = arith.constant 0 : i32
    %c0_i32_0 = arith.constant 0 : i32
    %c0_i32_1 = arith.constant 0 : i32
    return %c0_i32, %c0_i32_0 : i32, i32
  }
  func.func @transform_8(%arg0: i32) -> (i32, i32) {
    %c0_i32 = arith.constant 0 : i32
    %c0_i32_0 = arith.constant 0 : i32
    %c0_i32_1 = arith.constant 0 : i32
    return %c0_i32, %c0_i32_0 : i32, i32
  }
  func.func @transform_9(%arg0: i32) -> (i32, i32) {
    %c0_i32 = arith.constant 0 : i32
    %c0_i32_0 = arith.constant 0 : i32
    %c0_i32_1 = arith.constant 0 : i32
    return %c0_i32, %c0_i32_0 : i32, i32
  }
  func.func @transform_10(%arg0: i32) -> (i32, i32) {
    %c0_i32 = arith.constant 0 : i32
    %c0_i32_0 = arith.constant 0 : i32
    %c0_i32_1 = arith.constant 0 : i32
    return %c0_i32, %c0_i32_0 : i32, i32
  }
  func.func @transform_11(%arg0: i32) -> (i32, i32) {
    %c0_i32 = arith.constant 0 : i32
    %c0_i32_0 = arith.constant 0 : i32
    %c0_i32_1 = arith.constant 0 : i32
    return %c0_i32, %c0_i32_0 : i32, i32
  }
  func.func @transform_12(%arg0: i32) -> (i32, i32) {
    %c0_i32 = arith.constant 0 : i32
    %c0_i32_0 = arith.constant 0 : i32
    %c0_i32_1 = arith.constant 0 : i32
    return %c0_i32, %c0_i32_0 : i32, i32
  }
  func.func @transform_13(%arg0: i32) -> (i32, i32) {
    %c0_i32 = arith.constant 0 : i32
    %c0_i32_0 = arith.constant 0 : i32
    %c0_i32_1 = arith.constant 0 : i32
    return %c0_i32, %c0_i32_0 : i32, i32
  }
  func.func @transform_14(%arg0: i32) -> (i32, i32) {
    %c0_i32 = arith.constant 0 : i32
    %c0_i32_0 = arith.constant 0 : i32
    %c0_i32_1 = arith.constant 0 : i32
    return %c0_i32, %c0_i32_0 : i32, i32
  }
  func.func @transform_15(%arg0: i32) -> (i32, i32) {
    %c0_i32 = arith.constant 0 : i32
    %c0_i32_0 = arith.constant 0 : i32
    %c0_i32_1 = arith.constant 0 : i32
    return %c0_i32, %c0_i32_0 : i32, i32
  }
  func.func @transform_16(%arg0: i32) -> (i32, i32) {
    %c0_i32 = arith.constant 0 : i32
    %c0_i32_0 = arith.constant 0 : i32
    %c0_i32_1 = arith.constant 0 : i32
    return %c0_i32, %c0_i32_0 : i32, i32
  }
  func.func @transform_17(%arg0: i32) -> (i32, i32, i32) {
    %c0_i32 = arith.constant 0 : i32
    %c0_i32_0 = arith.constant 0 : i32
    %c0_i32_1 = arith.constant 0 : i32
    return %arg0, %c0_i32, %c0_i32_0 : i32, i32, i32
  }
}

</mosaic_0001>

<llo_original>
// kernel: tpu_custom_call.1
$region0: #{tpu_custom_call.1}
  #allocation0 [shape = 'u32[]', space=smem, size = 0x4, offset = 0x4, fixed_abs, tag = 'smem constant byte address 0x4 - core index']
  #allocation1 [shape = 'u32[144,128]{1,0:T(1,128)}', space=vmem, size = 0x12000, scoped, tag = 'internal scratch']
  %s0 = inlined_call_operand.vmem [shape: f32[2,8,32], index: 0, kind: input, shape index: {}]
  %s1 = inlined_call_operand.vmem [shape: bf16[32,32], index: 1, kind: input, shape index: {}]
  %s2 = inlined_call_operand.vmem [shape: bf16[32,32], index: 2, kind: input, shape index: {}]
  %s3 = inlined_call_operand.hbm [shape: bf16[32,32], index: 3, kind: input, shape index: {}]
  %s4 = inlined_call_operand.vmem [shape: f32[1,32], index: 4, kind: input, shape index: {}]
  %s5 = inlined_call_operand.vmem [shape: f32[1,32], index: 5, kind: input, shape index: {}]
  %s6 = inlined_call_operand.hbm [shape: f32[1,32], index: 6, kind: input, shape index: {}]
  %s7 = inlined_call_operand.hbm [shape: bf16[32,32], index: 7, kind: input, shape index: {}]
  %s8 = inlined_call_operand.hbm [shape: f32[1,32], index: 8, kind: input, shape index: {}]
  %s9 = inlined_call_operand.vmem [shape: bf16[32,64], index: 9, kind: input, shape index: {}]
  %s10 = inlined_call_operand.vmem [shape: f32[1,64], index: 10, kind: input, shape index: {}]
  %s11 = inlined_call_operand.vmem [shape: bf16[64,32], index: 11, kind: input, shape index: {}]
  %s12 = inlined_call_operand.vmem [shape: f32[1,32], index: 12, kind: input, shape index: {}]
  %s13 = inlined_call_operand.vmem [shape: f32[1,32], index: 13, kind: input, shape index: {}]
  %s14 = inlined_call_operand.vmem [shape: f32[1,32], index: 14, kind: input, shape index: {}]
  %s15 = inlined_call_operand.vmem [shape: f32[1,32], index: 15, kind: input, shape index: {}]
  %s16 = inlined_call_operand.vmem [shape: f32[1,32], index: 16, kind: input, shape index: {}]
  %s17 = inlined_call_operand.hbm [shape: f32[2,8,32], index: 17, kind: output, shape index: {}]
  %s18 = sld [smem:[#allocation0]]
  $region101: #{tpu_custom_call.1} parent=0
    _
  %s20 = ssub.s32 1, %s18
  %s21 = scalar_select 0, %s20, %s18
  $region1: #{tpu_custom_call.1} parent=0
    #allocation2 [shape = 'u8[8192]{0}', space=vmem, size = 0x2000, scoped, tag = 'input window, operand 3, single buffered']
    #allocation3 [shape = 's32[1]{0}', space=sflag, size = 0x4, scoped, tag = 'scoped memory for tpu_custom_call.1']
    #allocation4 [shape = 's32[1]{0}', space=sflag, size = 0x4, scoped, tag = 'scoped memory for tpu_custom_call.1']
    #allocation5 [shape = 'u8[512]{0}', space=vmem, size = 0x400, scoped, tag = 'input window, operand 6, single buffered']
    #allocation6 [shape = 's32[1]{0}', space=sflag, size = 0x4, scoped, tag = 'scoped memory for tpu_custom_call.1']
    #allocation7 [shape = 'u8[8192]{0}', space=vmem, size = 0x2000, scoped, tag = 'input window, operand 7, single buffered']
    #allocation8 [shape = 'u8[512]{0}', space=vmem, size = 0x400, scoped, tag = 'input window, operand 8, single buffered']
    #allocation9 [shape = 's32[1]{0}', space=sflag, size = 0x4, scoped, tag = 'scoped memory for tpu_custom_call.1']
    #allocation10 [shape = 'u8[8192]{0}', space=vmem, size = 0x2000, scoped, tag = 'output window, operand 0, single buffered']
    %22 = vsyncpa [#allocation3], 0
    %23 = vsyncpa [#allocation6], 0
    %24 = vsyncpa [#allocation9], 0
    %25 = vsyncpa [#allocation4], 0
    // Predicated region
    $region2: #{tpu_custom_call.1} parent=1 // pred_check
      _
    $region3: #{tpu_custom_call.1} parent=1 // pred_check_branch
      %27 = sbr.rel (0) target = $region5
    $region4: #{tpu_custom_call.1} parent=1 // pred_region
      _
    $region5: #{tpu_custom_call.1} parent=1 // pred_fallthru
      _
    // Predicated region
    $region6: #{tpu_custom_call.1} parent=1 // pred_check
      _
    $region7: #{tpu_custom_call.1} parent=1 // pred_check_branch
      %29 = sbr.rel (0) target = $region9
    $region8: #{tpu_custom_call.1} parent=1 // pred_region
      _
    $region9: #{tpu_custom_call.1} parent=1 // pred_fallthru
      _
    // Predicated region
    $region10: #{tpu_custom_call.1} parent=1 // pred_check
      _
    $region11: #{tpu_custom_call.1} parent=1 // pred_check_branch
      %31 = sbr.rel (0) target = $region13
    $region12: #{tpu_custom_call.1} parent=1 // pred_region
      _
    $region13: #{tpu_custom_call.1} parent=1 // pred_fallthru
      _
    // Predicated region
    $region14: #{tpu_custom_call.1} parent=1 // pred_check
      _
    $region15: #{tpu_custom_call.1} parent=1 // pred_check_branch
      %33 = sbr.rel (0) target = $region17
    $region16: #{tpu_custom_call.1} parent=1 // pred_region
      %s35 = ssub.s32 256, 256
      %36 = vsyncadd [#allocation3], %s35
      %s37 = sshll.u32 [#allocation2], 4
      %s38 = int_to_ptr.vmem [resolvable:$true] %s37
      %43 = dma.hbm_to_vmem [thread:$0]  %s3, 256, %s38, [#allocation3], 64, 64, 4
    $region17: #{tpu_custom_call.1} parent=1 // pred_fallthru
      _
    // Predicated region
    $region18: #{tpu_custom_call.1} parent=1 // pred_check
      _
    $region19: #{tpu_custom_call.1} parent=1 // pred_check_branch
      %45 = sbr.rel (0) target = $region21
    $region20: #{tpu_custom_call.1} parent=1 // pred_region
      _
    $region21: #{tpu_custom_call.1} parent=1 // pred_fallthru
      _
    // Predicated region
    $region22: #{tpu_custom_call.1} parent=1 // pred_check
      _
    $region23: #{tpu_custom_call.1} parent=1 // pred_check_branch
      %47 = sbr.rel (0) target = $region25
    $region24: #{tpu_custom_call.1} parent=1 // pred_region
      _
    $region25: #{tpu_custom_call.1} parent=1 // pred_fallthru
      _
    // Predicated region
    $region26: #{tpu_custom_call.1} parent=1 // pred_check
      _
    $region27: #{tpu_custom_call.1} parent=1 // pred_check_branch
      %49 = sbr.rel (0) target = $region29
    $region28: #{tpu_custom_call.1} parent=1 // pred_region
      %s51 = ssub.s32 16, 16
      %52 = vsyncadd [#allocation6], %s51
      %s54 = sshll.u32 [#allocation5], 4
      %s55 = int_to_ptr.vmem [resolvable:$true] %s54
      %57 = dma.hbm_to_vmem [thread:$0]  %s6, 16, %s55, [#allocation6]
    $region29: #{tpu_custom_call.1} parent=1 // pred_fallthru
      _
    // Predicated region
    $region30: #{tpu_custom_call.1} parent=1 // pred_check
      _
    $region31: #{tpu_custom_call.1} parent=1 // pred_check_branch
      %59 = sbr.rel (0) target = $region33
    $region32: #{tpu_custom_call.1} parent=1 // pred_region
      %s61 = ssub.s32 256, 256
      %62 = vsyncadd [#allocation6], %s61
      %s63 = sshll.u32 [#allocation7], 4
      %s64 = int_to_ptr.vmem [resolvable:$true] %s63
      %69 = dma.hbm_to_vmem [thread:$0]  %s7, 256, %s64, [#allocation6], 64, 64, 4
    $region33: #{tpu_custom_call.1} parent=1 // pred_fallthru
      _
    // Predicated region
    $region34: #{tpu_custom_call.1} parent=1 // pred_check
      _
    $region35: #{tpu_custom_call.1} parent=1 // pred_check_branch
      %71 = sbr.rel (0) target = $region37
    $region36: #{tpu_custom_call.1} parent=1 // pred_region
      %s73 = ssub.s32 16, 16
      %74 = vsyncadd [#allocation9], %s73
      %s76 = sshll.u32 [#allocation8], 4
      %s77 = int_to_ptr.vmem [resolvable:$true] %s76
      %79 = dma.hbm_to_vmem [thread:$0]  %s8, 16, %s77, [#allocation9]
    $region37: #{tpu_custom_call.1} parent=1 // pred_fallthru
      _
    // Predicated region
    $region38: #{tpu_custom_call.1} parent=1 // pred_check
      _
    $region39: #{tpu_custom_call.1} parent=1 // pred_check_branch
      %81 = sbr.rel (0) target = $region41
    $region40: #{tpu_custom_call.1} parent=1 // pred_region
      _
    $region41: #{tpu_custom_call.1} parent=1 // pred_fallthru
      _
    // Predicated region
    $region42: #{tpu_custom_call.1} parent=1 // pred_check
      _
    $region43: #{tpu_custom_call.1} parent=1 // pred_check_branch
      %83 = sbr.rel (0) target = $region45
    $region44: #{tpu_custom_call.1} parent=1 // pred_region
      _
    $region45: #{tpu_custom_call.1} parent=1 // pred_fallthru
      _
    // Predicated region
    $region46: #{tpu_custom_call.1} parent=1 // pred_check
      _
    $region47: #{tpu_custom_call.1} parent=1 // pred_check_branch
      %85 = sbr.rel (0) target = $region49
    $region48: #{tpu_custom_call.1} parent=1 // pred_region
      _
    $region49: #{tpu_custom_call.1} parent=1 // pred_fallthru
      _
    // Predicated region
    $region50: #{tpu_custom_call.1} parent=1 // pred_check
      _
    $region51: #{tpu_custom_call.1} parent=1 // pred_check_branch
      %87 = sbr.rel (0) target = $region53
    $region52: #{tpu_custom_call.1} parent=1 // pred_region
      _
    $region53: #{tpu_custom_call.1} parent=1 // pred_fallthru
      _
    // Predicated region
    $region54: #{tpu_custom_call.1} parent=1 // pred_check
      _
    $region55: #{tpu_custom_call.1} parent=1 // pred_check_branch
      %89 = sbr.rel (0) target = $region57
    $region56: #{tpu_custom_call.1} parent=1 // pred_region
      _
    $region57: #{tpu_custom_call.1} parent=1 // pred_fallthru
      _
    // Predicated region
    $region58: #{tpu_custom_call.1} parent=1 // pred_check
      _
    $region59: #{tpu_custom_call.1} parent=1 // pred_check_branch
      %91 = sbr.rel (0) target = $region61
    $region60: #{tpu_custom_call.1} parent=1 // pred_region
      _
    $region61: #{tpu_custom_call.1} parent=1 // pred_fallthru
      _
    // Predicated region
    $region62: #{tpu_custom_call.1} parent=1 // pred_check
      _
    $region63: #{tpu_custom_call.1} parent=1 // pred_check_branch
      %93 = sbr.rel (0) target = $region65
    $region64: #{tpu_custom_call.1} parent=1 // pred_region
      _
    $region65: #{tpu_custom_call.1} parent=1 // pred_fallthru
      _
    // Predicated region
    $region66: #{tpu_custom_call.1} parent=1 // pred_check
      _
    $region67: #{tpu_custom_call.1} parent=1 // pred_check_branch
      %95 = sbr.rel (0) target = $region69
    $region68: #{tpu_custom_call.1} parent=1 // pred_region
      _
    $region69: #{tpu_custom_call.1} parent=1 // pred_fallthru
      _
    // Predicated region
    $region70: #{tpu_custom_call.1} parent=1 // pred_check
      _
    $region71: #{tpu_custom_call.1} parent=1 // pred_check_branch
      %97 = sbr.rel (0) target = $region73
    $region72: #{tpu_custom_call.1} parent=1 // pred_region
      %98 = dma.done [#allocation3], 256
    $region73: #{tpu_custom_call.1} parent=1 // pred_fallthru
      _
    // Predicated region
    $region74: #{tpu_custom_call.1} parent=1 // pred_check
      _
    $region75: #{tpu_custom_call.1} parent=1 // pred_check_branch
      %100 = sbr.rel (0) target = $region77
    $region76: #{tpu_custom_call.1} parent=1 // pred_region
      %101 = dma.done [#allocation6], 16
    $region77: #{tpu_custom_call.1} parent=1 // pred_fallthru
      _
    // Predicated region
    $region78: #{tpu_custom_call.1} parent=1 // pred_check
      _
    $region79: #{tpu_custom_call.1} parent=1 // pred_check_branch
      %103 = sbr.rel (0) target = $region81
    $region80: #{tpu_custom_call.1} parent=1 // pred_region
      %104 = dma.done [#allocation6], 256
    $region81: #{tpu_custom_call.1} parent=1 // pred_fallthru
      _
    // Predicated region
    $region82: #{tpu_custom_call.1} parent=1 // pred_check
      _
    $region83: #{tpu_custom_call.1} parent=1 // pred_check_branch
      %106 = sbr.rel (0) target = $region85
    $region84: #{tpu_custom_call.1} parent=1 // pred_region
      %107 = dma.done [#allocation9], 16
    $region85: #{tpu_custom_call.1} parent=1 // pred_fallthru
      _
    %v109 = vld [vmem:[%s0] sm:$0xff]
    %v110 = vld [vmem:[%s0 + $0x8] sm:$0xff]
    %v111 = vlaneseq
    %v112 = vshrl.u32 %v111, 7
    %v113 = vlaneseq
    %v114 = vand.u32 %v113, 127
    %vm115 = vcmp.gt.s32.totalorder %v114, %v112
    %v116 = vsel %vm115, -1e+30, 0.0
    %v117 = vld [vmem:[%s4] sm:$0x1]
    %v119 = vlaneseq
    %v120 = vshrl.u32 %v119, 7
    %v121 = vsub.s32 0, %v120
    %v122 = vrot.slane %v117, %v121
    %v124 = vld [vmem:[%s5] sm:$0x1]
    %v126 = vlaneseq
    %v127 = vshrl.u32 %v126, 7
    %v128 = vsub.s32 0, %v127
    %v129 = vrot.slane %v124, %v128
    %v131 = vld [vmem:[#allocation5] sm:$0x1]
    %v133 = vlaneseq
    %v134 = vshrl.u32 %v133, 7
    %v135 = vsub.s32 0, %v134
    %v136 = vrot.slane %v131, %v135
    %v138 = vld [vmem:[#allocation8] sm:$0x1]
    %v140 = vlaneseq
    %v141 = vshrl.u32 %v140, 7
    %v142 = vsub.s32 0, %v141
    %v143 = vrot.slane %v138, %v142
    %v145 = vld [vmem:[%s10] sm:$0x1]
    %v147 = vlaneseq
    %v148 = vshrl.u32 %v147, 7
    %v149 = vsub.s32 0, %v148
    %v150 = vrot.slane %v145, %v149
    %v152 = vld [vmem:[%s12] sm:$0x1]
    %v154 = vlaneseq
    %v155 = vshrl.u32 %v154, 7
    %v156 = vsub.s32 0, %v155
    %v157 = vrot.slane %v152, %v156
    %v159 = vld [vmem:[%s13] sm:$0x1]
    %v161 = vlaneseq
    %v162 = vshrl.u32 %v161, 7
    %v163 = vsub.s32 0, %v162
    %v164 = vrot.slane %v159, %v163
    %v166 = vld [vmem:[%s14] sm:$0x1]
    %v168 = vlaneseq
    %v169 = vshrl.u32 %v168, 7
    %v170 = vsub.s32 0, %v169
    %v171 = vrot.slane %v166, %v170
    %v173 = vld [vmem:[%s15] sm:$0x1]
    %v175 = vlaneseq
    %v176 = vshrl.u32 %v175, 7
    %v177 = vsub.s32 0, %v176
    %v178 = vrot.slane %v173, %v177
    %v180 = vld [vmem:[%s16] sm:$0x1]
    %v182 = vlaneseq
    %v183 = vshrl.u32 %v182, 7
    %v184 = vsub.s32 0, %v183
    %v185 = vrot.slane %v180, %v184
    loop: start=0, step=1, limit=2
    $region86: #{tpu_custom_call.1} parent=1 // loop_pre_header
      _
    $region87: #{tpu_custom_call.1} parent=1 // loop_header
      %s188 = sphi 0, %s192
      %p189 = scmp.ge.s32.totalorder %s188, 2
      %v193 = vphi %v109, %v1558
      %v194 = vphi %v110, %v1559
    $region88: #{tpu_custom_call.1} parent=1 // loop_header_branch
      %191 = sbr.rel (%p189) target = $region92
    $region89: #{tpu_custom_call.1} parent=1 // loop_body
      %v195 = vpack.c.bf16 %v194, %v193
      %v196 = vld [vmem:[%s1] sm:$0xf]
      %v197 = vld [vmem:[%s1 + $0x4] sm:$0xf]
      %v198 = vld [vmem:[%s1 + $0x8] sm:$0xf]
      %v199 = vld [vmem:[%s1 + $0xc] sm:$0xf]
      %v204 = vunpack.c.l.b16 %v196
      %v205 = vunpack.c.l.b16 %v197
      %v206 = vunpack.c.l.b16 %v198
      %v207 = vunpack.c.l.b16 %v199
      %v208 = vpack.c.b16 %v205, %v204
      %v209 = vpack.c.b16 %v207, %v206
      %vm212 = vcmask 261120
      %v214 = vsel %vm212, %v195, 0
      %216 = vmatprep.subr.bf16.mxu0 0
      %217 = vmatpush1.bf16.msra.mxu0 %v208
      %218 = vmatprep.subr.bf16.mxu0 0
      %219 = vmatpush1.bf16.msra.mxu0 %v209
      %220 = vmatprep.subr.bf16.mxu0 0
      %221 = vmatpush1.bf16.msra.mxu0 0
      %222 = vmatprep.subr.bf16.mxu0 0
      %223 = vmatpush1.bf16.msra.mxu0 0
      %224 = vmatprep.subr.bf16.mxu0 0
      %225 = vmatpush1.bf16.msra.mxu0 0
      %226 = vmatprep.subr.bf16.mxu0 0
      %227 = vmatpush1.bf16.msra.mxu0 0
      %228 = vmatprep.subr.bf16.mxu0 0
      %229 = vmatpush1.bf16.msra.mxu0 0
      %230 = vmatprep.subr.bf16.mxu0 0
      %231 = vmatpush1.bf16.msra.mxu0 0
      %232 = vmatprep.subr.bf16.mxu0 0
      %233 = vmatpush1.bf16.msra.mxu0 0
      %234 = vmatprep.subr.bf16.mxu0 0
      %235 = vmatpush1.bf16.msra.mxu0 0
      %236 = vmatprep.subr.bf16.mxu0 0
      %237 = vmatpush1.bf16.msra.mxu0 0
      %238 = vmatprep.subr.bf16.mxu0 0
      %239 = vmatpush1.bf16.msra.mxu0 0
      %240 = vmatprep.subr.bf16.mxu0 0
      %241 = vmatpush1.bf16.msra.mxu0 0
      %242 = vmatprep.subr.bf16.mxu0 0
      %243 = vmatpush1.bf16.msra.mxu0 0
      %244 = vmatprep.subr.bf16.mxu0 0
      %245 = vmatpush1.bf16.msra.mxu0 0
      %246 = vmatprep.subr.bf16.mxu0 0
      %247 = vmatpush1.bf16.msra.mxu0 0
      %248 = vmatprep.mubr.bf16.mxu0 0
      %249 = vmatmul.mubr.bf16.gmra.mrb[0].mxu0 %v214
      %v250 = vpop.f32.mrb[0].mxu0
      %v251 = vadd.f32 %v122, %v250
      %v252 = vpop.f32.mrb[0].mxu0
      %v253 = vpop.f32.mrb[0].mxu0
      %v254 = vadd.f32 %v122, %v253
      %v255 = vpop.f32.mrb[0].mxu0
      %256 = vdwg.mxu0
      %v257 = vld [vmem:[%s2] sm:$0xf]
      %v258 = vld [vmem:[%s2 + $0x4] sm:$0xf]
      %v259 = vld [vmem:[%s2 + $0x8] sm:$0xf]
      %v260 = vld [vmem:[%s2 + $0xc] sm:$0xf]
      %v265 = vunpack.c.l.b16 %v257
      %v266 = vunpack.c.l.b16 %v258
      %v267 = vunpack.c.l.b16 %v259
      %v268 = vunpack.c.l.b16 %v260
      %v269 = vpack.c.b16 %v266, %v265
      %v270 = vpack.c.b16 %v268, %v267
      %273 = vmatprep.subr.bf16.mxu0 0
      %274 = vmatpush1.bf16.msra.mxu0 %v269
      %275 = vmatprep.subr.bf16.mxu0 0
      %276 = vmatpush1.bf16.msra.mxu0 %v270
      %277 = vmatprep.subr.bf16.mxu0 0
      %278 = vmatpush1.bf16.msra.mxu0 0
      %279 = vmatprep.subr.bf16.mxu0 0
      %280 = vmatpush1.bf16.msra.mxu0 0
      %281 = vmatprep.subr.bf16.mxu0 0
      %282 = vmatpush1.bf16.msra.mxu0 0
      %283 = vmatprep.subr.bf16.mxu0 0
      %284 = vmatpush1.bf16.msra.mxu0 0
      %285 = vmatprep.subr.bf16.mxu0 0
      %286 = vmatpush1.bf16.msra.mxu0 0
      %287 = vmatprep.subr.bf16.mxu0 0
      %288 = vmatpush1.bf16.msra.mxu0 0
      %289 = vmatprep.subr.bf16.mxu0 0
      %290 = vmatpush1.bf16.msra.mxu0 0
      %291 = vmatprep.subr.bf16.mxu0 0
      %292 = vmatpush1.bf16.msra.mxu0 0
      %293 = vmatprep.subr.bf16.mxu0 0
      %294 = vmatpush1.bf16.msra.mxu0 0
      %295 = vmatprep.subr.bf16.mxu0 0
      %296 = vmatpush1.bf16.msra.mxu0 0
      %297 = vmatprep.subr.bf16.mxu0 0
      %298 = vmatpush1.bf16.msra.mxu0 0
      %299 = vmatprep.subr.bf16.mxu0 0
      %300 = vmatpush1.bf16.msra.mxu0 0
      %301 = vmatprep.subr.bf16.mxu0 0
      %302 = vmatpush1.bf16.msra.mxu0 0
      %303 = vmatprep.subr.bf16.mxu0 0
      %304 = vmatpush1.bf16.msra.mxu0 0
      %305 = vmatprep.mubr.bf16.mxu0 0
      %306 = vmatmul.mubr.bf16.gmra.mrb[0].mxu0 %v214
      %v307 = vpop.f32.mrb[0].mxu0
      %v308 = vadd.f32 %v129, %v307
      %v309 = vpop.f32.mrb[0].mxu0
      %v310 = vpop.f32.mrb[0].mxu0
      %v311 = vadd.f32 %v129, %v310
      %v312 = vpop.f32.mrb[0].mxu0
      %313 = vdwg.mxu0
      %v314 = vld [vmem:[#allocation2] sm:$0xf]
      %v315 = vld [vmem:[#allocation2 + $0x4] sm:$0xf]
      %v316 = vld [vmem:[#allocation2 + $0x8] sm:$0xf]
      %v317 = vld [vmem:[#allocation2 + $0xc] sm:$0xf]
      %v322 = vunpack.c.l.b16 %v314
      %v323 = vunpack.c.l.b16 %v315
      %v324 = vunpack.c.l.b16 %v316
      %v325 = vunpack.c.l.b16 %v317
      %v326 = vpack.c.b16 %v323, %v322
      %v327 = vpack.c.b16 %v325, %v324
      %330 = vmatprep.subr.bf16.mxu0 0
      %331 = vmatpush1.bf16.msra.mxu0 %v326
      %332 = vmatprep.subr.bf16.mxu0 0
      %333 = vmatpush1.bf16.msra.mxu0 %v327
      %334 = vmatprep.subr.bf16.mxu0 0
      %335 = vmatpush1.bf16.msra.mxu0 0
      %336 = vmatprep.subr.bf16.mxu0 0
      %337 = vmatpush1.bf16.msra.mxu0 0
      %338 = vmatprep.subr.bf16.mxu0 0
      %339 = vmatpush1.bf16.msra.mxu0 0
      %340 = vmatprep.subr.bf16.mxu0 0
      %341 = vmatpush1.bf16.msra.mxu0 0
      %342 = vmatprep.subr.bf16.mxu0 0
      %343 = vmatpush1.bf16.msra.mxu0 0
      %344 = vmatprep.subr.bf16.mxu0 0
      %345 = vmatpush1.bf16.msra.mxu0 0
      %346 = vmatprep.subr.bf16.mxu0 0
      %347 = vmatpush1.bf16.msra.mxu0 0
      %348 = vmatprep.subr.bf16.mxu0 0
      %349 = vmatpush1.bf16.msra.mxu0 0
      %350 = vmatprep.subr.bf16.mxu0 0
      %351 = vmatpush1.bf16.msra.mxu0 0
      %352 = vmatprep.subr.bf16.mxu0 0
      %353 = vmatpush1.bf16.msra.mxu0 0
      %354 = vmatprep.subr.bf16.mxu0 0
      %355 = vmatpush1.bf16.msra.mxu0 0
      %356 = vmatprep.subr.bf16.mxu0 0
      %357 = vmatpush1.bf16.msra.mxu0 0
      %358 = vmatprep.subr.bf16.mxu0 0
      %359 = vmatpush1.bf16.msra.mxu0 0
      %360 = vmatprep.subr.bf16.mxu0 0
      %361 = vmatpush1.bf16.msra.mxu0 0
      %362 = vmatprep.mubr.bf16.mxu0 0
      %363 = vmatmul.mubr.bf16.gmra.mrb[0].mxu0 %v214
      %v364 = vpop.f32.mrb[0].mxu0
      %v365 = vadd.f32 %v136, %v364
      %v366 = vpop.f32.mrb[0].mxu0
      %v367 = vpop.f32.mrb[0].mxu0
      %v368 = vadd.f32 %v136, %v367
      %v369 = vpop.f32.mrb[0].mxu0
      %370 = vdwg.mxu0
      %v371 = vmul.f32 %v251, 0.35355338
      %v372 = vmul.f32 %v254, 0.35355338
      %v373 = vpack.c.bf16 %v372, %v371
      %v375 = vunpack.c.l.b16 %v373
      %v376 = vunpack.c.h.b16 %v373
      %v377 = vpack.c.b16 %v375, %v375
      %v378 = vpack.c.b16 %v376, %v376
      %v379 = vpack.c.bf16 %v311, %v308
      %v381 = vunpack.c.l.b16 %v379
      %v382 = vunpack.c.h.b16 %v379
      %v383 = vpack.c.b16 %v381, %v381
      %v384 = vpack.c.b16 %v382, %v382
      %v385 = vpack.c.bf16 %v368, %v365
      %v387 = vunpack.c.l.b16 %v385
      %v388 = vunpack.c.h.b16 %v385
      %v389 = vpack.c.b16 %v387, %v387
      %v390 = vpack.c.b16 %v388, %v388
      %vm391 = vcmask 64512
      %v393 = vsel %vm391, %v377, 0
      %v396 = vsel %vm391, %v383, 0
      %398 = vmatprep.subr.bf16.mxu0 0
      %399 = vmatpush1.bf16.xpose.msra.mxu0 %v396
      %400 = vmatprep.subr.bf16.mxu0 0
      %401 = vmatpush1.bf16.xpose.msra.mxu0 0
      %402 = vmatprep.subr.bf16.mxu0 0
      %403 = vmatpush1.bf16.xpose.msra.mxu0 0
      %404 = vmatprep.subr.bf16.mxu0 0
      %405 = vmatpush1.bf16.xpose.msra.mxu0 0
      %406 = vmatprep.subr.bf16.mxu0 0
      %407 = vmatpush1.bf16.xpose.msra.mxu0 0
      %408 = vmatprep.subr.bf16.mxu0 0
      %409 = vmatpush1.bf16.xpose.msra.mxu0 0
      %410 = vmatprep.subr.bf16.mxu0 0
      %411 = vmatpush1.bf16.xpose.msra.mxu0 0
      %412 = vmatprep.subr.bf16.mxu0 0
      %413 = vmatpush1.bf16.xpose.msra.mxu0 0
      %414 = vmatprep.subr.bf16.mxu0 0
      %415 = vmatpush1.bf16.xpose.msra.mxu0 0
      %416 = vmatprep.subr.bf16.mxu0 0
      %417 = vmatpush1.bf16.xpose.msra.mxu0 0
      %418 = vmatprep.subr.bf16.mxu0 0
      %419 = vmatpush1.bf16.xpose.msra.mxu0 0
      %420 = vmatprep.subr.bf16.mxu0 0
      %421 = vmatpush1.bf16.xpose.msra.mxu0 0
      %422 = vmatprep.subr.bf16.mxu0 0
      %423 = vmatpush1.bf16.xpose.msra.mxu0 0
      %424 = vmatprep.subr.bf16.mxu0 0
      %425 = vmatpush1.bf16.xpose.msra.mxu0 0
      %426 = vmatprep.subr.bf16.mxu0 0
      %427 = vmatpush1.bf16.xpose.msra.mxu0 0
      %428 = vmatprep.subr.bf16.mxu0 0
      %429 = vmatpush1.bf16.xpose.msra.mxu0 0
      %430 = vmatprep.mubr.bf16.mxu0 0
      %431 = vmatmul.mubr.bf16.gmra.mrb[0].mxu0 %v393
      %v432 = vpop.f32.mrb[0].mxu0
      %v433 = vadd.f32 %v116, %v432
      %v434 = vpop.f32.mrb[0].mxu0
      %v435 = vpop.f32.mrb[0].mxu0
      %v436 = vpop.f32.mrb[0].mxu0
      %437 = vdwg.mxu0
      %v439 = vsel %vm391, %v378, 0
      %v442 = vsel %vm391, %v384, 0
      %444 = vmatprep.subr.bf16.mxu0 0
      %445 = vmatpush1.bf16.xpose.msra.mxu0 %v442
      %446 = vmatprep.subr.bf16.mxu0 0
      %447 = vmatpush1.bf16.xpose.msra.mxu0 0
      %448 = vmatprep.subr.bf16.mxu0 0
      %449 = vmatpush1.bf16.xpose.msra.mxu0 0
      %450 = vmatprep.subr.bf16.mxu0 0
      %451 = vmatpush1.bf16.xpose.msra.mxu0 0
      %452 = vmatprep.subr.bf16.mxu0 0
      %453 = vmatpush1.bf16.xpose.msra.mxu0 0
      %454 = vmatprep.subr.bf16.mxu0 0
      %455 = vmatpush1.bf16.xpose.msra.mxu0 0
      %456 = vmatprep.subr.bf16.mxu0 0
      %457 = vmatpush1.bf16.xpose.msra.mxu0 0
      %458 = vmatprep.subr.bf16.mxu0 0
      %459 = vmatpush1.bf16.xpose.msra.mxu0 0
      %460 = vmatprep.subr.bf16.mxu0 0
      %461 = vmatpush1.bf16.xpose.msra.mxu0 0
      %462 = vmatprep.subr.bf16.mxu0 0
      %463 = vmatpush1.bf16.xpose.msra.mxu0 0
      %464 = vmatprep.subr.bf16.mxu0 0
      %465 = vmatpush1.bf16.xpose.msra.mxu0 0
      %466 = vmatprep.subr.bf16.mxu0 0
      %467 = vmatpush1.bf16.xpose.msra.mxu0 0
      %468 = vmatprep.subr.bf16.mxu0 0
      %469 = vmatpush1.bf16.xpose.msra.mxu0 0
      %470 = vmatprep.subr.bf16.mxu0 0
      %471 = vmatpush1.bf16.xpose.msra.mxu0 0
      %472 = vmatprep.subr.bf16.mxu0 0
      %473 = vmatpush1.bf16.xpose.msra.mxu0 0
      %474 = vmatprep.subr.bf16.mxu0 0
      %475 = vmatpush1.bf16.xpose.msra.mxu0 0
      %476 = vmatprep.mubr.bf16.mxu0 0
      %477 = vmatmul.mubr.bf16.gmra.mrb[0].mxu0 %v439
      %v478 = vpop.f32.mrb[0].mxu0
      %v479 = vadd.f32 %v116, %v478
      %v480 = vpop.f32.mrb[0].mxu0
      %v481 = vpop.f32.mrb[0].mxu0
      %v482 = vpop.f32.mrb[0].mxu0
      %483 = vdwg.mxu0
      %v484 = vsel %vm391, %v433, -inf
      %485 = vmax.xlane.f32.xlu0 %v484
      %v486 = vpop.xlane.xlu0 %485
      %v487 = vsel %vm391, %v479, -inf
      %488 = vmax.xlane.f32.xlu0 %v487
      %v489 = vpop.xlane.xlu0 %488
      %v490 = vsub.f32 %v433, %v486
      %v491 = vsub.f32 %v479, %v489
      %v492 = vmul.f32 %v490, 1.442695
      %v493 = vpow.pop %v492
      %v494 = vmul.f32 %v491, 1.442695
      %v495 = vpow.pop %v494
      %v496 = vsel %vm391, %v493, 0.0
      %497 = vadd.xlane.f32.xlu0 %v496
      %v498 = vpop.xlane.xlu0 %497
      %v499 = vsel %vm391, %v495, 0.0
      %500 = vadd.xlane.f32.xlu0 %v499
      %v501 = vpop.xlane.xlu0 %500
      %v502 = vrcp.pop %v498
      %v503 = vmul.f32 %v493, %v502
      %v504 = vrcp.pop %v501
      %v505 = vmul.f32 %v495, %v504
      %v506 = vpack.c.bf16 %v503, %v503
      %v507 = vpack.c.bf16 %v505, %v505
      %v509 = vsel %vm391, %v506, 0
      %vm511 = vcmask 1043456
      %v513 = vsel %vm511, %v389, 0
      %515 = vmatprep.subr.bf16.mxu0 0
      %516 = vmatpush1.bf16.msra.mxu0 %v513
      %517 = vmatprep.subr.bf16.mxu0 0
      %518 = vmatpush1.bf16.msra.mxu0 0
      %519 = vmatprep.subr.bf16.mxu0 0
      %520 = vmatpush1.bf16.msra.mxu0 0
      %521 = vmatprep.subr.bf16.mxu0 0
      %522 = vmatpush1.bf16.msra.mxu0 0
      %523 = vmatprep.subr.bf16.mxu0 0
      %524 = vmatpush1.bf16.msra.mxu0 0
      %525 = vmatprep.subr.bf16.mxu0 0
      %526 = vmatpush1.bf16.msra.mxu0 0
      %527 = vmatprep.subr.bf16.mxu0 0
      %528 = vmatpush1.bf16.msra.mxu0 0
      %529 = vmatprep.subr.bf16.mxu0 0
      %530 = vmatpush1.bf16.msra.mxu0 0
      %531 = vmatprep.subr.bf16.mxu0 0
      %532 = vmatpush1.bf16.msra.mxu0 0
      %533 = vmatprep.subr.bf16.mxu0 0
      %534 = vmatpush1.bf16.msra.mxu0 0
      %535 = vmatprep.subr.bf16.mxu0 0
      %536 = vmatpush1.bf16.msra.mxu0 0
      %537 = vmatprep.subr.bf16.mxu0 0
      %538 = vmatpush1.bf16.msra.mxu0 0
      %539 = vmatprep.subr.bf16.mxu0 0
      %540 = vmatpush1.bf16.msra.mxu0 0
      %541 = vmatprep.subr.bf16.mxu0 0
      %542 = vmatpush1.bf16.msra.mxu0 0
      %543 = vmatprep.subr.bf16.mxu0 0
      %544 = vmatpush1.bf16.msra.mxu0 0
      %545 = vmatprep.subr.bf16.mxu0 0
      %546 = vmatpush1.bf16.msra.mxu0 0
      %547 = vmatprep.mubr.bf16.mxu0 0
      %548 = vmatmul.mubr.bf16.gmra.mrb[0].mxu0 %v509
      %v549 = vpop.f32.mrb[0].mxu0
      %v550 = vadd.f32 0.0, %v549
      %v551 = vpop.f32.mrb[0].mxu0
      %v552 = vpop.f32.mrb[0].mxu0
      %v553 = vpop.f32.mrb[0].mxu0
      %554 = vdwg.mxu0
      %v556 = vsel %vm391, %v507, 0
      %v559 = vsel %vm511, %v390, 0
      %561 = vmatprep.subr.bf16.mxu0 0
      %562 = vmatpush1.bf16.msra.mxu0 %v559
      %563 = vmatprep.subr.bf16.mxu0 0
      %564 = vmatpush1.bf16.msra.mxu0 0
      %565 = vmatprep.subr.bf16.mxu0 0
      %566 = vmatpush1.bf16.msra.mxu0 0
      %567 = vmatprep.subr.bf16.mxu0 0
      %568 = vmatpush1.bf16.msra.mxu0 0
      %569 = vmatprep.subr.bf16.mxu0 0
      %570 = vmatpush1.bf16.msra.mxu0 0
      %571 = vmatprep.subr.bf16.mxu0 0
      %572 = vmatpush1.bf16.msra.mxu0 0
      %573 = vmatprep.subr.bf16.mxu0 0
      %574 = vmatpush1.bf16.msra.mxu0 0
      %575 = vmatprep.subr.bf16.mxu0 0
      %576 = vmatpush1.bf16.msra.mxu0 0
      %577 = vmatprep.subr.bf16.mxu0 0
      %578 = vmatpush1.bf16.msra.mxu0 0
      %579 = vmatprep.subr.bf16.mxu0 0
      %580 = vmatpush1.bf16.msra.mxu0 0
      %581 = vmatprep.subr.bf16.mxu0 0
      %582 = vmatpush1.bf16.msra.mxu0 0
      %583 = vmatprep.subr.bf16.mxu0 0
      %584 = vmatpush1.bf16.msra.mxu0 0
      %585 = vmatprep.subr.bf16.mxu0 0
      %586 = vmatpush1.bf16.msra.mxu0 0
      %587 = vmatprep.subr.bf16.mxu0 0
      %588 = vmatpush1.bf16.msra.mxu0 0
      %589 = vmatprep.subr.bf16.mxu0 0
      %590 = vmatpush1.bf16.msra.mxu0 0
      %591 = vmatprep.subr.bf16.mxu0 0
      %592 = vmatpush1.bf16.msra.mxu0 0
      %593 = vmatprep.mubr.bf16.mxu0 0
      %594 = vmatmul.mubr.bf16.gmra.mrb[0].mxu0 %v556
      %v595 = vpop.f32.mrb[0].mxu0
      %v596 = vadd.f32 0.0, %v595
      %v597 = vpop.f32.mrb[0].mxu0
      %v598 = vpop.f32.mrb[0].mxu0
      %v599 = vpop.f32.mrb[0].mxu0
      %600 = vdwg.mxu0
      %601 = vrot.lane.b32.xlu0 %v377, 120
      %v602 = vpop.permute.xlu0 %601
      %603 = vrot.lane.b32.xlu0 %v383, 120
      %v604 = vpop.permute.xlu0 %603
      %v606 = vsel %vm391, %v602, 0
      %v609 = vsel %vm391, %v604, 0
      %611 = vmatprep.subr.bf16.mxu0 0
      %612 = vmatpush1.bf16.xpose.msra.mxu0 %v609
      %613 = vmatprep.subr.bf16.mxu0 0
      %614 = vmatpush1.bf16.xpose.msra.mxu0 0
      %615 = vmatprep.subr.bf16.mxu0 0
      %616 = vmatpush1.bf16.xpose.msra.mxu0 0
      %617 = vmatprep.subr.bf16.mxu0 0
      %618 = vmatpush1.bf16.xpose.msra.mxu0 0
      %619 = vmatprep.subr.bf16.mxu0 0
      %620 = vmatpush1.bf16.xpose.msra.mxu0 0
      %621 = vmatprep.subr.bf16.mxu0 0
      %622 = vmatpush1.bf16.xpose.msra.mxu0 0
      %623 = vmatprep.subr.bf16.mxu0 0
      %624 = vmatpush1.bf16.xpose.msra.mxu0 0
      %625 = vmatprep.subr.bf16.mxu0 0
      %626 = vmatpush1.bf16.xpose.msra.mxu0 0
      %627 = vmatprep.subr.bf16.mxu0 0
      %628 = vmatpush1.bf16.xpose.msra.mxu0 0
      %629 = vmatprep.subr.bf16.mxu0 0
      %630 = vmatpush1.bf16.xpose.msra.mxu0 0
      %631 = vmatprep.subr.bf16.mxu0 0
      %632 = vmatpush1.bf16.xpose.msra.mxu0 0
      %633 = vmatprep.subr.bf16.mxu0 0
      %634 = vmatpush1.bf16.xpose.msra.mxu0 0
      %635 = vmatprep.subr.bf16.mxu0 0
      %636 = vmatpush1.bf16.xpose.msra.mxu0 0
      %637 = vmatprep.subr.bf16.mxu0 0
      %638 = vmatpush1.bf16.xpose.msra.mxu0 0
      %639 = vmatprep.subr.bf16.mxu0 0
      %640 = vmatpush1.bf16.xpose.msra.mxu0 0
      %641 = vmatprep.subr.bf16.mxu0 0
      %642 = vmatpush1.bf16.xpose.msra.mxu0 0
      %643 = vmatprep.mubr.bf16.mxu0 0
      %644 = vmatmul.mubr.bf16.gmra.mrb[0].mxu0 %v606
      %v645 = vpop.f32.mrb[0].mxu0
      %v646 = vadd.f32 %v116, %v645
      %v647 = vpop.f32.mrb[0].mxu0
      %v648 = vpop.f32.mrb[0].mxu0
      %v649 = vpop.f32.mrb[0].mxu0
      %650 = vdwg.mxu0
      %651 = vrot.lane.b32.xlu0 %v378, 120
      %v652 = vpop.permute.xlu0 %651
      %653 = vrot.lane.b32.xlu0 %v384, 120
      %v654 = vpop.permute.xlu0 %653
      %v656 = vsel %vm391, %v652, 0
      %v659 = vsel %vm391, %v654, 0
      %661 = vmatprep.subr.bf16.mxu0 0
      %662 = vmatpush1.bf16.xpose.msra.mxu0 %v659
      %663 = vmatprep.subr.bf16.mxu0 0
      %664 = vmatpush1.bf16.xpose.msra.mxu0 0
      %665 = vmatprep.subr.bf16.mxu0 0
      %666 = vmatpush1.bf16.xpose.msra.mxu0 0
      %667 = vmatprep.subr.bf16.mxu0 0
      %668 = vmatpush1.bf16.xpose.msra.mxu0 0
      %669 = vmatprep.subr.bf16.mxu0 0
      %670 = vmatpush1.bf16.xpose.msra.mxu0 0
      %671 = vmatprep.subr.bf16.mxu0 0
      %672 = vmatpush1.bf16.xpose.msra.mxu0 0
      %673 = vmatprep.subr.bf16.mxu0 0
      %674 = vmatpush1.bf16.xpose.msra.mxu0 0
      %675 = vmatprep.subr.bf16.mxu0 0
      %676 = vmatpush1.bf16.xpose.msra.mxu0 0
      %677 = vmatprep.subr.bf16.mxu0 0
      %678 = vmatpush1.bf16.xpose.msra.mxu0 0
      %679 = vmatprep.subr.bf16.mxu0 0
      %680 = vmatpush1.bf16.xpose.msra.mxu0 0
      %681 = vmatprep.subr.bf16.mxu0 0
      %682 = vmatpush1.bf16.xpose.msra.mxu0 0
      %683 = vmatprep.subr.bf16.mxu0 0
      %684 = vmatpush1.bf16.xpose.msra.mxu0 0
      %685 = vmatprep.subr.bf16.mxu0 0
      %686 = vmatpush1.bf16.xpose.msra.mxu0 0
      %687 = vmatprep.subr.bf16.mxu0 0
      %688 = vmatpush1.bf16.xpose.msra.mxu0 0
      %689 = vmatprep.subr.bf16.mxu0 0
      %690 = vmatpush1.bf16.xpose.msra.mxu0 0
      %691 = vmatprep.subr.bf16.mxu0 0
      %692 = vmatpush1.bf16.xpose.msra.mxu0 0
      %693 = vmatprep.mubr.bf16.mxu0 0
      %694 = vmatmul.mubr.bf16.gmra.mrb[0].mxu0 %v656
      %v695 = vpop.f32.mrb[0].mxu0
      %v696 = vadd.f32 %v116, %v695
      %v697 = vpop.f32.mrb[0].mxu0
      %v698 = vpop.f32.mrb[0].mxu0
      %v699 = vpop.f32.mrb[0].mxu0
      %700 = vdwg.mxu0
      %v701 = vsel %vm391, %v646, -inf
      %702 = vmax.xlane.f32.xlu0 %v701
      %v703 = vpop.xlane.xlu0 %702
      %v704 = vsel %vm391, %v696, -inf
      %705 = vmax.xlane.f32.xlu0 %v704
      %v706 = vpop.xlane.xlu0 %705
      %v707 = vsub.f32 %v646, %v703
      %v708 = vsub.f32 %v696, %v706
      %v709 = vmul.f32 %v707, 1.442695
      %v710 = vpow.pop %v709
      %v711 = vmul.f32 %v708, 1.442695
      %v712 = vpow.pop %v711
      %v713 = vsel %vm391, %v710, 0.0
      %714 = vadd.xlane.f32.xlu0 %v713
      %v715 = vpop.xlane.xlu0 %714
      %v716 = vsel %vm391, %v712, 0.0
      %717 = vadd.xlane.f32.xlu0 %v716
      %v718 = vpop.xlane.xlu0 %717
      %v719 = vrcp.pop %v715
      %v720 = vmul.f32 %v710, %v719
      %v721 = vrcp.pop %v718
      %v722 = vmul.f32 %v712, %v721
      %v723 = vpack.c.bf16 %v720, %v720
      %v724 = vpack.c.bf16 %v722, %v722
      %725 = vrot.lane.b32.xlu0 %v389, 120
      %v726 = vpop.permute.xlu0 %725
      %v728 = vsel %vm391, %v723, 0
      %v731 = vsel %vm511, %v726, 0
      %733 = vmatprep.subr.bf16.mxu0 0
      %734 = vmatpush1.bf16.msra.mxu0 %v731
      %735 = vmatprep.subr.bf16.mxu0 0
      %736 = vmatpush1.bf16.msra.mxu0 0
      %737 = vmatprep.subr.bf16.mxu0 0
      %738 = vmatpush1.bf16.msra.mxu0 0
      %739 = vmatprep.subr.bf16.mxu0 0
      %740 = vmatpush1.bf16.msra.mxu0 0
      %741 = vmatprep.subr.bf16.mxu0 0
      %742 = vmatpush1.bf16.msra.mxu0 0
      %743 = vmatprep.subr.bf16.mxu0 0
      %744 = vmatpush1.bf16.msra.mxu0 0
      %745 = vmatprep.subr.bf16.mxu0 0
      %746 = vmatpush1.bf16.msra.mxu0 0
      %747 = vmatprep.subr.bf16.mxu0 0
      %748 = vmatpush1.bf16.msra.mxu0 0
      %749 = vmatprep.subr.bf16.mxu0 0
      %750 = vmatpush1.bf16.msra.mxu0 0
      %751 = vmatprep.subr.bf16.mxu0 0
      %752 = vmatpush1.bf16.msra.mxu0 0
      %753 = vmatprep.subr.bf16.mxu0 0
      %754 = vmatpush1.bf16.msra.mxu0 0
      %755 = vmatprep.subr.bf16.mxu0 0
      %756 = vmatpush1.bf16.msra.mxu0 0
      %757 = vmatprep.subr.bf16.mxu0 0
      %758 = vmatpush1.bf16.msra.mxu0 0
      %759 = vmatprep.subr.bf16.mxu0 0
      %760 = vmatpush1.bf16.msra.mxu0 0
      %761 = vmatprep.subr.bf16.mxu0 0
      %762 = vmatpush1.bf16.msra.mxu0 0
      %763 = vmatprep.subr.bf16.mxu0 0
      %764 = vmatpush1.bf16.msra.mxu0 0
      %765 = vmatprep.mubr.bf16.mxu0 0
      %766 = vmatmul.mubr.bf16.gmra.mrb[0].mxu0 %v728
      %v767 = vpop.f32.mrb[0].mxu0
      %v768 = vadd.f32 0.0, %v767
      %v769 = vpop.f32.mrb[0].mxu0
      %v770 = vpop.f32.mrb[0].mxu0
      %v771 = vpop.f32.mrb[0].mxu0
      %772 = vdwg.mxu0
      %773 = vrot.lane.b32.xlu0 %v390, 120
      %v774 = vpop.permute.xlu0 %773
      %v776 = vsel %vm391, %v724, 0
      %v779 = vsel %vm511, %v774, 0
      %781 = vmatprep.subr.bf16.mxu0 0
      %782 = vmatpush1.bf16.msra.mxu0 %v779
      %783 = vmatprep.subr.bf16.mxu0 0
      %784 = vmatpush1.bf16.msra.mxu0 0
      %785 = vmatprep.subr.bf16.mxu0 0
      %786 = vmatpush1.bf16.msra.mxu0 0
      %787 = vmatprep.subr.bf16.mxu0 0
      %788 = vmatpush1.bf16.msra.mxu0 0
      %789 = vmatprep.subr.bf16.mxu0 0
      %790 = vmatpush1.bf16.msra.mxu0 0
      %791 = vmatprep.subr.bf16.mxu0 0
      %792 = vmatpush1.bf16.msra.mxu0 0
      %793 = vmatprep.subr.bf16.mxu0 0
      %794 = vmatpush1.bf16.msra.mxu0 0
      %795 = vmatprep.subr.bf16.mxu0 0
      %796 = vmatpush1.bf16.msra.mxu0 0
      %797 = vmatprep.subr.bf16.mxu0 0
      %798 = vmatpush1.bf16.msra.mxu0 0
      %799 = vmatprep.subr.bf16.mxu0 0
      %800 = vmatpush1.bf16.msra.mxu0 0
      %801 = vmatprep.subr.bf16.mxu0 0
      %802 = vmatpush1.bf16.msra.mxu0 0
      %803 = vmatprep.subr.bf16.mxu0 0
      %804 = vmatpush1.bf16.msra.mxu0 0
      %805 = vmatprep.subr.bf16.mxu0 0
      %806 = vmatpush1.bf16.msra.mxu0 0
      %807 = vmatprep.subr.bf16.mxu0 0
      %808 = vmatpush1.bf16.msra.mxu0 0
      %809 = vmatprep.subr.bf16.mxu0 0
      %810 = vmatpush1.bf16.msra.mxu0 0
      %811 = vmatprep.subr.bf16.mxu0 0
      %812 = vmatpush1.bf16.msra.mxu0 0
      %813 = vmatprep.mubr.bf16.mxu0 0
      %814 = vmatmul.mubr.bf16.gmra.mrb[0].mxu0 %v776
      %v815 = vpop.f32.mrb[0].mxu0
      %v816 = vadd.f32 0.0, %v815
      %v817 = vpop.f32.mrb[0].mxu0
      %v818 = vpop.f32.mrb[0].mxu0
      %v819 = vpop.f32.mrb[0].mxu0
      %820 = vdwg.mxu0
      %821 = vrot.lane.b32.xlu0 %v377, 112
      %v822 = vpop.permute.xlu0 %821
      %823 = vrot.lane.b32.xlu0 %v383, 112
      %v824 = vpop.permute.xlu0 %823
      %v826 = vsel %vm391, %v822, 0
      %v829 = vsel %vm391, %v824, 0
      %831 = vmatprep.subr.bf16.mxu0 0
      %832 = vmatpush1.bf16.xpose.msra.mxu0 %v829
      %833 = vmatprep.subr.bf16.mxu0 0
      %834 = vmatpush1.bf16.xpose.msra.mxu0 0
      %835 = vmatprep.subr.bf16.mxu0 0
      %836 = vmatpush1.bf16.xpose.msra.mxu0 0
      %837 = vmatprep.subr.bf16.mxu0 0
      %838 = vmatpush1.bf16.xpose.msra.mxu0 0
      %839 = vmatprep.subr.bf16.mxu0 0
      %840 = vmatpush1.bf16.xpose.msra.mxu0 0
      %841 = vmatprep.subr.bf16.mxu0 0
      %842 = vmatpush1.bf16.xpose.msra.mxu0 0
      %843 = vmatprep.subr.bf16.mxu0 0
      %844 = vmatpush1.bf16.xpose.msra.mxu0 0
      %845 = vmatprep.subr.bf16.mxu0 0
      %846 = vmatpush1.bf16.xpose.msra.mxu0 0
      %847 = vmatprep.subr.bf16.mxu0 0
      %848 = vmatpush1.bf16.xpose.msra.mxu0 0
      %849 = vmatprep.subr.bf16.mxu0 0
      %850 = vmatpush1.bf16.xpose.msra.mxu0 0
      %851 = vmatprep.subr.bf16.mxu0 0
      %852 = vmatpush1.bf16.xpose.msra.mxu0 0
      %853 = vmatprep.subr.bf16.mxu0 0
      %854 = vmatpush1.bf16.xpose.msra.mxu0 0
      %855 = vmatprep.subr.bf16.mxu0 0
      %856 = vmatpush1.bf16.xpose.msra.mxu0 0
      %857 = vmatprep.subr.bf16.mxu0 0
      %858 = vmatpush1.bf16.xpose.msra.mxu0 0
      %859 = vmatprep.subr.bf16.mxu0 0
      %860 = vmatpush1.bf16.xpose.msra.mxu0 0
      %861 = vmatprep.subr.bf16.mxu0 0
      %862 = vmatpush1.bf16.xpose.msra.mxu0 0
      %863 = vmatprep.mubr.bf16.mxu0 0
      %864 = vmatmul.mubr.bf16.gmra.mrb[0].mxu0 %v826
      %v865 = vpop.f32.mrb[0].mxu0
      %v866 = vadd.f32 %v116, %v865
      %v867 = vpop.f32.mrb[0].mxu0
      %v868 = vpop.f32.mrb[0].mxu0
      %v869 = vpop.f32.mrb[0].mxu0
      %870 = vdwg.mxu0
      %871 = vrot.lane.b32.xlu0 %v378, 112
      %v872 = vpop.permute.xlu0 %871
      %873 = vrot.lane.b32.xlu0 %v384, 112
      %v874 = vpop.permute.xlu0 %873
      %v876 = vsel %vm391, %v872, 0
      %v879 = vsel %vm391, %v874, 0
      %881 = vmatprep.subr.bf16.mxu0 0
      %882 = vmatpush1.bf16.xpose.msra.mxu0 %v879
      %883 = vmatprep.subr.bf16.mxu0 0
      %884 = vmatpush1.bf16.xpose.msra.mxu0 0
      %885 = vmatprep.subr.bf16.mxu0 0
      %886 = vmatpush1.bf16.xpose.msra.mxu0 0
      %887 = vmatprep.subr.bf16.mxu0 0
      %888 = vmatpush1.bf16.xpose.msra.mxu0 0
      %889 = vmatprep.subr.bf16.mxu0 0
      %890 = vmatpush1.bf16.xpose.msra.mxu0 0
      %891 = vmatprep.subr.bf16.mxu0 0
      %892 = vmatpush1.bf16.xpose.msra.mxu0 0
      %893 = vmatprep.subr.bf16.mxu0 0
      %894 = vmatpush1.bf16.xpose.msra.mxu0 0
      %895 = vmatprep.subr.bf16.mxu0 0
      %896 = vmatpush1.bf16.xpose.msra.mxu0 0
      %897 = vmatprep.subr.bf16.mxu0 0
      %898 = vmatpush1.bf16.xpose.msra.mxu0 0
      %899 = vmatprep.subr.bf16.mxu0 0
      %900 = vmatpush1.bf16.xpose.msra.mxu0 0
      %901 = vmatprep.subr.bf16.mxu0 0
      %902 = vmatpush1.bf16.xpose.msra.mxu0 0
      %903 = vmatprep.subr.bf16.mxu0 0
      %904 = vmatpush1.bf16.xpose.msra.mxu0 0
      %905 = vmatprep.subr.bf16.mxu0 0
      %906 = vmatpush1.bf16.xpose.msra.mxu0 0
      %907 = vmatprep.subr.bf16.mxu0 0
      %908 = vmatpush1.bf16.xpose.msra.mxu0 0
      %909 = vmatprep.subr.bf16.mxu0 0
      %910 = vmatpush1.bf16.xpose.msra.mxu0 0
      %911 = vmatprep.subr.bf16.mxu0 0
      %912 = vmatpush1.bf16.xpose.msra.mxu0 0
      %913 = vmatprep.mubr.bf16.mxu0 0
      %914 = vmatmul.mubr.bf16.gmra.mrb[0].mxu0 %v876
      %v915 = vpop.f32.mrb[0].mxu0
      %v916 = vadd.f32 %v116, %v915
      %v917 = vpop.f32.mrb[0].mxu0
      %v918 = vpop.f32.mrb[0].mxu0
      %v919 = vpop.f32.mrb[0].mxu0
      %920 = vdwg.mxu0
      %v921 = vsel %vm391, %v866, -inf
      %922 = vmax.xlane.f32.xlu0 %v921
      %v923 = vpop.xlane.xlu0 %922
      %v924 = vsel %vm391, %v916, -inf
      %925 = vmax.xlane.f32.xlu0 %v924
      %v926 = vpop.xlane.xlu0 %925
      %v927 = vsub.f32 %v866, %v923
      %v928 = vsub.f32 %v916, %v926
      %v929 = vmul.f32 %v927, 1.442695
      %v930 = vpow.pop %v929
      %v931 = vmul.f32 %v928, 1.442695
      %v932 = vpow.pop %v931
      %v933 = vsel %vm391, %v930, 0.0
      %934 = vadd.xlane.f32.xlu0 %v933
      %v935 = vpop.xlane.xlu0 %934
      %v936 = vsel %vm391, %v932, 0.0
      %937 = vadd.xlane.f32.xlu0 %v936
      %v938 = vpop.xlane.xlu0 %937
      %v939 = vrcp.pop %v935
      %v940 = vmul.f32 %v930, %v939
      %v941 = vrcp.pop %v938
      %v942 = vmul.f32 %v932, %v941
      %v943 = vpack.c.bf16 %v940, %v940
      %v944 = vpack.c.bf16 %v942, %v942
      %945 = vrot.lane.b32.xlu0 %v389, 112
      %v946 = vpop.permute.xlu0 %945
      %v948 = vsel %vm391, %v943, 0
      %v951 = vsel %vm511, %v946, 0
      %953 = vmatprep.subr.bf16.mxu0 0
      %954 = vmatpush1.bf16.msra.mxu0 %v951
      %955 = vmatprep.subr.bf16.mxu0 0
      %956 = vmatpush1.bf16.msra.mxu0 0
      %957 = vmatprep.subr.bf16.mxu0 0
      %958 = vmatpush1.bf16.msra.mxu0 0
      %959 = vmatprep.subr.bf16.mxu0 0
      %960 = vmatpush1.bf16.msra.mxu0 0
      %961 = vmatprep.subr.bf16.mxu0 0
      %962 = vmatpush1.bf16.msra.mxu0 0
      %963 = vmatprep.subr.bf16.mxu0 0
      %964 = vmatpush1.bf16.msra.mxu0 0
      %965 = vmatprep.subr.bf16.mxu0 0
      %966 = vmatpush1.bf16.msra.mxu0 0
      %967 = vmatprep.subr.bf16.mxu0 0
      %968 = vmatpush1.bf16.msra.mxu0 0
      %969 = vmatprep.subr.bf16.mxu0 0
      %970 = vmatpush1.bf16.msra.mxu0 0
      %971 = vmatprep.subr.bf16.mxu0 0
      %972 = vmatpush1.bf16.msra.mxu0 0
      %973 = vmatprep.subr.bf16.mxu0 0
      %974 = vmatpush1.bf16.msra.mxu0 0
      %975 = vmatprep.subr.bf16.mxu0 0
      %976 = vmatpush1.bf16.msra.mxu0 0
      %977 = vmatprep.subr.bf16.mxu0 0
      %978 = vmatpush1.bf16.msra.mxu0 0
      %979 = vmatprep.subr.bf16.mxu0 0
      %980 = vmatpush1.bf16.msra.mxu0 0
      %981 = vmatprep.subr.bf16.mxu0 0
      %982 = vmatpush1.bf16.msra.mxu0 0
      %983 = vmatprep.subr.bf16.mxu0 0
      %984 = vmatpush1.bf16.msra.mxu0 0
      %985 = vmatprep.mubr.bf16.mxu0 0
      %986 = vmatmul.mubr.bf16.gmra.mrb[0].mxu0 %v948
      %v987 = vpop.f32.mrb[0].mxu0
      %v988 = vadd.f32 0.0, %v987
      %v989 = vpop.f32.mrb[0].mxu0
      %v990 = vpop.f32.mrb[0].mxu0
      %v991 = vpop.f32.mrb[0].mxu0
      %992 = vdwg.mxu0
      %993 = vrot.lane.b32.xlu0 %v390, 112
      %v994 = vpop.permute.xlu0 %993
      %v996 = vsel %vm391, %v944, 0
      %v999 = vsel %vm511, %v994, 0
      %1001 = vmatprep.subr.bf16.mxu0 0
      %1002 = vmatpush1.bf16.msra.mxu0 %v999
      %1003 = vmatprep.subr.bf16.mxu0 0
      %1004 = vmatpush1.bf16.msra.mxu0 0
      %1005 = vmatprep.subr.bf16.mxu0 0
      %1006 = vmatpush1.bf16.msra.mxu0 0
      %1007 = vmatprep.subr.bf16.mxu0 0
      %1008 = vmatpush1.bf16.msra.mxu0 0
      %1009 = vmatprep.subr.bf16.mxu0 0
      %1010 = vmatpush1.bf16.msra.mxu0 0
      %1011 = vmatprep.subr.bf16.mxu0 0
      %1012 = vmatpush1.bf16.msra.mxu0 0
      %1013 = vmatprep.subr.bf16.mxu0 0
      %1014 = vmatpush1.bf16.msra.mxu0 0
      %1015 = vmatprep.subr.bf16.mxu0 0
      %1016 = vmatpush1.bf16.msra.mxu0 0
      %1017 = vmatprep.subr.bf16.mxu0 0
      %1018 = vmatpush1.bf16.msra.mxu0 0
      %1019 = vmatprep.subr.bf16.mxu0 0
      %1020 = vmatpush1.bf16.msra.mxu0 0
      %1021 = vmatprep.subr.bf16.mxu0 0
      %1022 = vmatpush1.bf16.msra.mxu0 0
      %1023 = vmatprep.subr.bf16.mxu0 0
      %1024 = vmatpush1.bf16.msra.mxu0 0
      %1025 = vmatprep.subr.bf16.mxu0 0
      %1026 = vmatpush1.bf16.msra.mxu0 0
      %1027 = vmatprep.subr.bf16.mxu0 0
      %1028 = vmatpush1.bf16.msra.mxu0 0
      %1029 = vmatprep.subr.bf16.mxu0 0
      %1030 = vmatpush1.bf16.msra.mxu0 0
      %1031 = vmatprep.subr.bf16.mxu0 0
      %1032 = vmatpush1.bf16.msra.mxu0 0
      %1033 = vmatprep.mubr.bf16.mxu0 0
      %1034 = vmatmul.mubr.bf16.gmra.mrb[0].mxu0 %v996
      %v1035 = vpop.f32.mrb[0].mxu0
      %v1036 = vadd.f32 0.0, %v1035
      %v1037 = vpop.f32.mrb[0].mxu0
      %v1038 = vpop.f32.mrb[0].mxu0
      %v1039 = vpop.f32.mrb[0].mxu0
      %1040 = vdwg.mxu0
      %1041 = vrot.lane.b32.xlu0 %v377, 104
      %v1042 = vpop.permute.xlu0 %1041
      %1043 = vrot.lane.b32.xlu0 %v383, 104
      %v1044 = vpop.permute.xlu0 %1043
      %v1046 = vsel %vm391, %v1042, 0
      %v1049 = vsel %vm391, %v1044, 0
      %1051 = vmatprep.subr.bf16.mxu0 0
      %1052 = vmatpush1.bf16.xpose.msra.mxu0 %v1049
      %1053 = vmatprep.subr.bf16.mxu0 0
      %1054 = vmatpush1.bf16.xpose.msra.mxu0 0
      %1055 = vmatprep.subr.bf16.mxu0 0
      %1056 = vmatpush1.bf16.xpose.msra.mxu0 0
      %1057 = vmatprep.subr.bf16.mxu0 0
      %1058 = vmatpush1.bf16.xpose.msra.mxu0 0
      %1059 = vmatprep.subr.bf16.mxu0 0
      %1060 = vmatpush1.bf16.xpose.msra.mxu0 0
      %1061 = vmatprep.subr.bf16.mxu0 0
      %1062 = vmatpush1.bf16.xpose.msra.mxu0 0
      %1063 = vmatprep.subr.bf16.mxu0 0
      %1064 = vmatpush1.bf16.xpose.msra.mxu0 0
      %1065 = vmatprep.subr.bf16.mxu0 0
      %1066 = vmatpush1.bf16.xpose.msra.mxu0 0
      %1067 = vmatprep.subr.bf16.mxu0 0
      %1068 = vmatpush1.bf16.xpose.msra.mxu0 0
      %1069 = vmatprep.subr.bf16.mxu0 0
      %1070 = vmatpush1.bf16.xpose.msra.mxu0 0
      %1071 = vmatprep.subr.bf16.mxu0 0
      %1072 = vmatpush1.bf16.xpose.msra.mxu0 0
      %1073 = vmatprep.subr.bf16.mxu0 0
      %1074 = vmatpush1.bf16.xpose.msra.mxu0 0
      %1075 = vmatprep.subr.bf16.mxu0 0
      %1076 = vmatpush1.bf16.xpose.msra.mxu0 0
      %1077 = vmatprep.subr.bf16.mxu0 0
      %1078 = vmatpush1.bf16.xpose.msra.mxu0 0
      %1079 = vmatprep.subr.bf16.mxu0 0
      %1080 = vmatpush1.bf16.xpose.msra.mxu0 0
      %1081 = vmatprep.subr.bf16.mxu0 0
      %1082 = vmatpush1.bf16.xpose.msra.mxu0 0
      %1083 = vmatprep.mubr.bf16.mxu0 0
      %1084 = vmatmul.mubr.bf16.gmra.mrb[0].mxu0 %v1046
      %v1085 = vpop.f32.mrb[0].mxu0
      %v1086 = vadd.f32 %v116, %v1085
      %v1087 = vpop.f32.mrb[0].mxu0
      %v1088 = vpop.f32.mrb[0].mxu0
      %v1089 = vpop.f32.mrb[0].mxu0
      %1090 = vdwg.mxu0
      %1091 = vrot.lane.b32.xlu0 %v378, 104
      %v1092 = vpop.permute.xlu0 %1091
      %1093 = vrot.lane.b32.xlu0 %v384, 104
      %v1094 = vpop.permute.xlu0 %1093
      %v1096 = vsel %vm391, %v1092, 0
      %v1099 = vsel %vm391, %v1094, 0
      %1101 = vmatprep.subr.bf16.mxu0 0
      %1102 = vmatpush1.bf16.xpose.msra.mxu0 %v1099
      %1103 = vmatprep.subr.bf16.mxu0 0
      %1104 = vmatpush1.bf16.xpose.msra.mxu0 0
      %1105 = vmatprep.subr.bf16.mxu0 0
      %1106 = vmatpush1.bf16.xpose.msra.mxu0 0
      %1107 = vmatprep.subr.bf16.mxu0 0
      %1108 = vmatpush1.bf16.xpose.msra.mxu0 0
      %1109 = vmatprep.subr.bf16.mxu0 0
      %1110 = vmatpush1.bf16.xpose.msra.mxu0 0
      %1111 = vmatprep.subr.bf16.mxu0 0
      %1112 = vmatpush1.bf16.xpose.msra.mxu0 0
      %1113 = vmatprep.subr.bf16.mxu0 0
      %1114 = vmatpush1.bf16.xpose.msra.mxu0 0
      %1115 = vmatprep.subr.bf16.mxu0 0
      %1116 = vmatpush1.bf16.xpose.msra.mxu0 0
      %1117 = vmatprep.subr.bf16.mxu0 0
      %1118 = vmatpush1.bf16.xpose.msra.mxu0 0
      %1119 = vmatprep.subr.bf16.mxu0 0
      %1120 = vmatpush1.bf16.xpose.msra.mxu0 0
      %1121 = vmatprep.subr.bf16.mxu0 0
      %1122 = vmatpush1.bf16.xpose.msra.mxu0 0
      %1123 = vmatprep.subr.bf16.mxu0 0
      %1124 = vmatpush1.bf16.xpose.msra.mxu0 0
      %1125 = vmatprep.subr.bf16.mxu0 0
      %1126 = vmatpush1.bf16.xpose.msra.mxu0 0
      %1127 = vmatprep.subr.bf16.mxu0 0
      %1128 = vmatpush1.bf16.xpose.msra.mxu0 0
      %1129 = vmatprep.subr.bf16.mxu0 0
      %1130 = vmatpush1.bf16.xpose.msra.mxu0 0
      %1131 = vmatprep.subr.bf16.mxu0 0
      %1132 = vmatpush1.bf16.xpose.msra.mxu0 0
      %1133 = vmatprep.mubr.bf16.mxu0 0
      %1134 = vmatmul.mubr.bf16.gmra.mrb[0].mxu0 %v1096
      %v1135 = vpop.f32.mrb[0].mxu0
      %v1136 = vadd.f32 %v116, %v1135
      %v1137 = vpop.f32.mrb[0].mxu0
      %v1138 = vpop.f32.mrb[0].mxu0
      %v1139 = vpop.f32.mrb[0].mxu0
      %1140 = vdwg.mxu0
      %v1141 = vsel %vm391, %v1086, -inf
      %1142 = vmax.xlane.f32.xlu0 %v1141
      %v1143 = vpop.xlane.xlu0 %1142
      %v1144 = vsel %vm391, %v1136, -inf
      %1145 = vmax.xlane.f32.xlu0 %v1144
      %v1146 = vpop.xlane.xlu0 %1145
      %v1147 = vsub.f32 %v1086, %v1143
      %v1148 = vsub.f32 %v1136, %v1146
      %v1149 = vmul.f32 %v1147, 1.442695
      %v1150 = vpow.pop %v1149
      %v1151 = vmul.f32 %v1148, 1.442695
      %v1152 = vpow.pop %v1151
      %v1153 = vsel %vm391, %v1150, 0.0
      %1154 = vadd.xlane.f32.xlu0 %v1153
      %v1155 = vpop.xlane.xlu0 %1154
      %v1156 = vsel %vm391, %v1152, 0.0
      %1157 = vadd.xlane.f32.xlu0 %v1156
      %v1158 = vpop.xlane.xlu0 %1157
      %v1159 = vrcp.pop %v1155
      %v1160 = vmul.f32 %v1150, %v1159
      %v1161 = vrcp.pop %v1158
      %v1162 = vmul.f32 %v1152, %v1161
      %v1163 = vpack.c.bf16 %v1160, %v1160
      %v1164 = vpack.c.bf16 %v1162, %v1162
      %1165 = vrot.lane.b32.xlu0 %v389, 104
      %v1166 = vpop.permute.xlu0 %1165
      %v1168 = vsel %vm391, %v1163, 0
      %v1171 = vsel %vm511, %v1166, 0
      %1173 = vmatprep.subr.bf16.mxu0 0
      %1174 = vmatpush1.bf16.msra.mxu0 %v1171
      %1175 = vmatprep.subr.bf16.mxu0 0
      %1176 = vmatpush1.bf16.msra.mxu0 0
      %1177 = vmatprep.subr.bf16.mxu0 0
      %1178 = vmatpush1.bf16.msra.mxu0 0
      %1179 = vmatprep.subr.bf16.mxu0 0
      %1180 = vmatpush1.bf16.msra.mxu0 0
      %1181 = vmatprep.subr.bf16.mxu0 0
      %1182 = vmatpush1.bf16.msra.mxu0 0
      %1183 = vmatprep.subr.bf16.mxu0 0
      %1184 = vmatpush1.bf16.msra.mxu0 0
      %1185 = vmatprep.subr.bf16.mxu0 0
      %1186 = vmatpush1.bf16.msra.mxu0 0
      %1187 = vmatprep.subr.bf16.mxu0 0
      %1188 = vmatpush1.bf16.msra.mxu0 0
      %1189 = vmatprep.subr.bf16.mxu0 0
      %1190 = vmatpush1.bf16.msra.mxu0 0
      %1191 = vmatprep.subr.bf16.mxu0 0
      %1192 = vmatpush1.bf16.msra.mxu0 0
      %1193 = vmatprep.subr.bf16.mxu0 0
      %1194 = vmatpush1.bf16.msra.mxu0 0
      %1195 = vmatprep.subr.bf16.mxu0 0
      %1196 = vmatpush1.bf16.msra.mxu0 0
      %1197 = vmatprep.subr.bf16.mxu0 0
      %1198 = vmatpush1.bf16.msra.mxu0 0
      %1199 = vmatprep.subr.bf16.mxu0 0
      %1200 = vmatpush1.bf16.msra.mxu0 0
      %1201 = vmatprep.subr.bf16.mxu0 0
      %1202 = vmatpush1.bf16.msra.mxu0 0
      %1203 = vmatprep.subr.bf16.mxu0 0
      %1204 = vmatpush1.bf16.msra.mxu0 0
      %1205 = vmatprep.mubr.bf16.mxu0 0
      %1206 = vmatmul.mubr.bf16.gmra.mrb[0].mxu0 %v1168
      %v1207 = vpop.f32.mrb[0].mxu0
      %v1208 = vadd.f32 0.0, %v1207
      %v1209 = vpop.f32.mrb[0].mxu0
      %v1210 = vpop.f32.mrb[0].mxu0
      %v1211 = vpop.f32.mrb[0].mxu0
      %1212 = vdwg.mxu0
      %1213 = vrot.lane.b32.xlu0 %v390, 104
      %v1214 = vpop.permute.xlu0 %1213
      %v1216 = vsel %vm391, %v1164, 0
      %v1219 = vsel %vm511, %v1214, 0
      %1221 = vmatprep.subr.bf16.mxu0 0
      %1222 = vmatpush1.bf16.msra.mxu0 %v1219
      %1223 = vmatprep.subr.bf16.mxu0 0
      %1224 = vmatpush1.bf16.msra.mxu0 0
      %1225 = vmatprep.subr.bf16.mxu0 0
      %1226 = vmatpush1.bf16.msra.mxu0 0
      %1227 = vmatprep.subr.bf16.mxu0 0
      %1228 = vmatpush1.bf16.msra.mxu0 0
      %1229 = vmatprep.subr.bf16.mxu0 0
      %1230 = vmatpush1.bf16.msra.mxu0 0
      %1231 = vmatprep.subr.bf16.mxu0 0
      %1232 = vmatpush1.bf16.msra.mxu0 0
      %1233 = vmatprep.subr.bf16.mxu0 0
      %1234 = vmatpush1.bf16.msra.mxu0 0
      %1235 = vmatprep.subr.bf16.mxu0 0
      %1236 = vmatpush1.bf16.msra.mxu0 0
      %1237 = vmatprep.subr.bf16.mxu0 0
      %1238 = vmatpush1.bf16.msra.mxu0 0
      %1239 = vmatprep.subr.bf16.mxu0 0
      %1240 = vmatpush1.bf16.msra.mxu0 0
      %1241 = vmatprep.subr.bf16.mxu0 0
      %1242 = vmatpush1.bf16.msra.mxu0 0
      %1243 = vmatprep.subr.bf16.mxu0 0
      %1244 = vmatpush1.bf16.msra.mxu0 0
      %1245 = vmatprep.subr.bf16.mxu0 0
      %1246 = vmatpush1.bf16.msra.mxu0 0
      %1247 = vmatprep.subr.bf16.mxu0 0
      %1248 = vmatpush1.bf16.msra.mxu0 0
      %1249 = vmatprep.subr.bf16.mxu0 0
      %1250 = vmatpush1.bf16.msra.mxu0 0
      %1251 = vmatprep.subr.bf16.mxu0 0
      %1252 = vmatpush1.bf16.msra.mxu0 0
      %1253 = vmatprep.mubr.bf16.mxu0 0
      %1254 = vmatmul.mubr.bf16.gmra.mrb[0].mxu0 %v1216
      %v1255 = vpop.f32.mrb[0].mxu0
      %v1256 = vadd.f32 0.0, %v1255
      %v1257 = vpop.f32.mrb[0].mxu0
      %v1258 = vpop.f32.mrb[0].mxu0
      %v1259 = vpop.f32.mrb[0].mxu0
      %1260 = vdwg.mxu0
      %1263 = vrot.lane.b32.xlu0 %v768, 8
      %v1264 = vpop.permute.xlu0 %1263
      %1265 = vrot.lane.b32.xlu0 %v816, 8
      %v1266 = vpop.permute.xlu0 %1265
      %1271 = vrot.lane.b32.xlu0 %v988, 16
      %v1272 = vpop.permute.xlu0 %1271
      %1273 = vrot.lane.b32.xlu0 %v1036, 16
      %v1274 = vpop.permute.xlu0 %1273
      %1279 = vrot.lane.b32.xlu0 %v1208, 24
      %v1280 = vpop.permute.xlu0 %1279
      %1281 = vrot.lane.b32.xlu0 %v1256, 24
      %v1282 = vpop.permute.xlu0 %1281
      %v1285 = vsel %vm391, %v550, %v1264
      %v1286 = vsel %vm391, %v596, %v1266
      %vm1287 = vcmask 130048
      %v1288 = vsel %vm1287, %v1285, %v1272
      %v1289 = vsel %vm1287, %v1286, %v1274
      %vm1290 = vcmask 195584
      %v1291 = vsel %vm1290, %v1288, %v1280
      %v1292 = vsel %vm1290, %v1289, %v1282
      %v1293 = vpack.c.bf16 %v1292, %v1291
      %v1294 = vld [vmem:[#allocation7] sm:$0xf]
      %v1295 = vld [vmem:[#allocation7 + $0x4] sm:$0xf]
      %v1296 = vld [vmem:[#allocation7 + $0x8] sm:$0xf]
      %v1297 = vld [vmem:[#allocation7 + $0xc] sm:$0xf]
      %v1302 = vunpack.c.l.b16 %v1294
      %v1303 = vunpack.c.l.b16 %v1295
      %v1304 = vunpack.c.l.b16 %v1296
      %v1305 = vunpack.c.l.b16 %v1297
      %v1306 = vpack.c.b16 %v1303, %v1302
      %v1307 = vpack.c.b16 %v1305, %v1304
      %v1311 = vsel %vm212, %v1293, 0
      %1313 = vmatprep.subr.bf16.mxu0 0
      %1314 = vmatpush1.bf16.msra.mxu0 %v1306
      %1315 = vmatprep.subr.bf16.mxu0 0
      %1316 = vmatpush1.bf16.msra.mxu0 %v1307
      %1317 = vmatprep.subr.bf16.mxu0 0
      %1318 = vmatpush1.bf16.msra.mxu0 0
      %1319 = vmatprep.subr.bf16.mxu0 0
      %1320 = vmatpush1.bf16.msra.mxu0 0
      %1321 = vmatprep.subr.bf16.mxu0 0
      %1322 = vmatpush1.bf16.msra.mxu0 0
      %1323 = vmatprep.subr.bf16.mxu0 0
      %1324 = vmatpush1.bf16.msra.mxu0 0
      %1325 = vmatprep.subr.bf16.mxu0 0
      %1326 = vmatpush1.bf16.msra.mxu0 0
      %1327 = vmatprep.subr.bf16.mxu0 0
      %1328 = vmatpush1.bf16.msra.mxu0 0
      %1329 = vmatprep.subr.bf16.mxu0 0
      %1330 = vmatpush1.bf16.msra.mxu0 0
      %1331 = vmatprep.subr.bf16.mxu0 0
      %1332 = vmatpush1.bf16.msra.mxu0 0
      %1333 = vmatprep.subr.bf16.mxu0 0
      %1334 = vmatpush1.bf16.msra.mxu0 0
      %1335 = vmatprep.subr.bf16.mxu0 0
      %1336 = vmatpush1.bf16.msra.mxu0 0
      %1337 = vmatprep.subr.bf16.mxu0 0
      %1338 = vmatpush1.bf16.msra.mxu0 0
      %1339 = vmatprep.subr.bf16.mxu0 0
      %1340 = vmatpush1.bf16.msra.mxu0 0
      %1341 = vmatprep.subr.bf16.mxu0 0
      %1342 = vmatpush1.bf16.msra.mxu0 0
      %1343 = vmatprep.subr.bf16.mxu0 0
      %1344 = vmatpush1.bf16.msra.mxu0 0
      %1345 = vmatprep.mubr.bf16.mxu0 0
      %1346 = vmatmul.mubr.bf16.gmra.mrb[0].mxu0 %v1311
      %v1347 = vpop.f32.mrb[0].mxu0
      %v1348 = vadd.f32 %v143, %v1347
      %v1349 = vpop.f32.mrb[0].mxu0
      %v1350 = vpop.f32.mrb[0].mxu0
      %v1351 = vadd.f32 %v143, %v1350
      %v1352 = vpop.f32.mrb[0].mxu0
      %1353 = vdwg.mxu0
      %v1354 = vadd.f32 %v193, %v1348
      %v1355 = vadd.f32 %v194, %v1351
      %v1356 = vsel %vm212, %v1354, 0.0
      %1357 = vadd.xlane.f32.xlu0 %v1356
      %v1358 = vpop.xlane.xlu0 %1357
      %v1359 = vsel %vm212, %v1355, 0.0
      %1360 = vadd.xlane.f32.xlu0 %v1359
      %v1361 = vpop.xlane.xlu0 %1360
      %v1362 = vrcp.pop 32.0
      %v1363 = vmul.f32 %v1358, %v1362
      %v1364 = vmul.f32 %v1361, %v1362
      %v1365 = vsub.f32 %v1354, %v1363
      %v1366 = vsub.f32 %v1355, %v1364
      %v1367 = vmul.f32 %v1365, %v1365
      %v1368 = vmul.f32 %v1366, %v1366
      %v1369 = vsel %vm212, %v1367, 0.0
      %1370 = vadd.xlane.f32.xlu0 %v1369
      %v1371 = vpop.xlane.xlu0 %1370
      %v1372 = vsel %vm212, %v1368, 0.0
      %1373 = vadd.xlane.f32.xlu0 %v1372
      %v1374 = vpop.xlane.xlu0 %1373
      %v1375 = vmul.f32 %v1371, %v1362
      %v1376 = vmul.f32 %v1374, %v1362
      %v1377 = vadd.f32 %v1375, 1e-05
      %v1378 = vadd.f32 %v1376, 1e-05
      %v1379 = vrsqrt.pop %v1377
      %v1380 = vrsqrt.pop %v1378
      %v1381 = vmul.f32 %v1365, %v1379
      %v1382 = vmul.f32 %v1366, %v1380
      %v1383 = vmul.f32 %v1381, %v164
      %v1384 = vmul.f32 %v1382, %v164
      %v1385 = vadd.f32 %v1383, %v171
      %v1386 = vadd.f32 %v1384, %v171
      %v1387 = vpack.c.bf16 %v1386, %v1385
      %v1388 = vld [vmem:[%s9] sm:$0xf]
      %v1389 = vld [vmem:[%s9 + $0x4] sm:$0xf]
      %v1390 = vld [vmem:[%s9 + $0x8] sm:$0xf]
      %v1391 = vld [vmem:[%s9 + $0xc] sm:$0xf]
      %v1396 = vunpack.c.l.b16 %v1388
      %v1397 = vunpack.c.l.b16 %v1389
      %v1398 = vunpack.c.l.b16 %v1390
      %v1399 = vunpack.c.l.b16 %v1391
      %v1400 = vpack.c.b16 %v1397, %v1396
      %v1401 = vpack.c.b16 %v1399, %v1398
      %v1405 = vsel %vm212, %v1387, 0
      %1407 = vmatprep.subr.bf16.mxu0 0
      %1408 = vmatpush1.bf16.msra.mxu0 %v1400
      %1409 = vmatprep.subr.bf16.mxu0 0
      %1410 = vmatpush1.bf16.msra.mxu0 %v1401
      %1411 = vmatprep.subr.bf16.mxu0 0
      %1412 = vmatpush1.bf16.msra.mxu0 0
      %1413 = vmatprep.subr.bf16.mxu0 0
      %1414 = vmatpush1.bf16.msra.mxu0 0
      %1415 = vmatprep.subr.bf16.mxu0 0
      %1416 = vmatpush1.bf16.msra.mxu0 0
      %1417 = vmatprep.subr.bf16.mxu0 0
      %1418 = vmatpush1.bf16.msra.mxu0 0
      %1419 = vmatprep.subr.bf16.mxu0 0
      %1420 = vmatpush1.bf16.msra.mxu0 0
      %1421 = vmatprep.subr.bf16.mxu0 0
      %1422 = vmatpush1.bf16.msra.mxu0 0
      %1423 = vmatprep.subr.bf16.mxu0 0
      %1424 = vmatpush1.bf16.msra.mxu0 0
      %1425 = vmatprep.subr.bf16.mxu0 0
      %1426 = vmatpush1.bf16.msra.mxu0 0
      %1427 = vmatprep.subr.bf16.mxu0 0
      %1428 = vmatpush1.bf16.msra.mxu0 0
      %1429 = vmatprep.subr.bf16.mxu0 0
      %1430 = vmatpush1.bf16.msra.mxu0 0
      %1431 = vmatprep.subr.bf16.mxu0 0
      %1432 = vmatpush1.bf16.msra.mxu0 0
      %1433 = vmatprep.subr.bf16.mxu0 0
      %1434 = vmatpush1.bf16.msra.mxu0 0
      %1435 = vmatprep.subr.bf16.mxu0 0
      %1436 = vmatpush1.bf16.msra.mxu0 0
      %1437 = vmatprep.subr.bf16.mxu0 0
      %1438 = vmatpush1.bf16.msra.mxu0 0
      %1439 = vmatprep.mubr.bf16.mxu0 0
      %1440 = vmatmul.mubr.bf16.gmra.mrb[0].mxu0 %v1405
      %v1441 = vpop.f32.mrb[0].mxu0
      %v1442 = vadd.f32 %v150, %v1441
      %v1443 = vpop.f32.mrb[0].mxu0
      %v1444 = vpop.f32.mrb[0].mxu0
      %v1445 = vadd.f32 %v150, %v1444
      %v1446 = vpop.f32.mrb[0].mxu0
      %1447 = vdwg.mxu0
      %v1448 = vmax.f32 %v1442, 0.0
      %v1449 = vmax.f32 %v1445, 0.0
      %v1450 = vpack.c.bf16 %v1449, %v1448
      %v1451 = vld [vmem:[%s11] sm:$0xf]
      %v1452 = vld [vmem:[%s11 + $0x4] sm:$0xf]
      %v1453 = vld [vmem:[%s11 + $0x8] sm:$0xf]
      %v1454 = vld [vmem:[%s11 + $0xc] sm:$0xf]
      %v1455 = vld [vmem:[%s11 + $0x10] sm:$0xf]
      %v1456 = vld [vmem:[%s11 + $0x14] sm:$0xf]
      %v1457 = vld [vmem:[%s11 + $0x18] sm:$0xf]
      %v1458 = vld [vmem:[%s11 + $0x1c] sm:$0xf]
      %v1467 = vunpack.c.l.b16 %v1451
      %v1468 = vunpack.c.l.b16 %v1452
      %v1469 = vunpack.c.l.b16 %v1453
      %v1470 = vunpack.c.l.b16 %v1454
      %v1471 = vunpack.c.l.b16 %v1455
      %v1472 = vunpack.c.l.b16 %v1456
      %v1473 = vunpack.c.l.b16 %v1457
      %v1474 = vunpack.c.l.b16 %v1458
      %v1475 = vpack.c.b16 %v1468, %v1467
      %v1476 = vpack.c.b16 %v1470, %v1469
      %v1477 = vpack.c.b16 %v1472, %v1471
      %v1478 = vpack.c.b16 %v1474, %v1473
      %vm1483 = vcmask 523264
      %v1485 = vsel %vm1483, %v1450, 0
      %1487 = vmatprep.subr.bf16.mxu0 0
      %1488 = vmatpush1.bf16.msra.mxu0 %v1475
      %1489 = vmatprep.subr.bf16.mxu0 0
      %1490 = vmatpush1.bf16.msra.mxu0 %v1476
      %1491 = vmatprep.subr.bf16.mxu0 0
      %1492 = vmatpush1.bf16.msra.mxu0 %v1477
      %1493 = vmatprep.subr.bf16.mxu0 0
      %1494 = vmatpush1.bf16.msra.mxu0 %v1478
      %1495 = vmatprep.subr.bf16.mxu0 0
      %1496 = vmatpush1.bf16.msra.mxu0 0
      %1497 = vmatprep.subr.bf16.mxu0 0
      %1498 = vmatpush1.bf16.msra.mxu0 0
      %1499 = vmatprep.subr.bf16.mxu0 0
      %1500 = vmatpush1.bf16.msra.mxu0 0
      %1501 = vmatprep.subr.bf16.mxu0 0
      %1502 = vmatpush1.bf16.msra.mxu0 0
      %1503 = vmatprep.subr.bf16.mxu0 0
      %1504 = vmatpush1.bf16.msra.mxu0 0
      %1505 = vmatprep.subr.bf16.mxu0 0
      %1506 = vmatpush1.bf16.msra.mxu0 0
      %1507 = vmatprep.subr.bf16.mxu0 0
      %1508 = vmatpush1.bf16.msra.mxu0 0
      %1509 = vmatprep.subr.bf16.mxu0 0
      %1510 = vmatpush1.bf16.msra.mxu0 0
      %1511 = vmatprep.subr.bf16.mxu0 0
      %1512 = vmatpush1.bf16.msra.mxu0 0
      %1513 = vmatprep.subr.bf16.mxu0 0
      %1514 = vmatpush1.bf16.msra.mxu0 0
      %1515 = vmatprep.subr.bf16.mxu0 0
      %1516 = vmatpush1.bf16.msra.mxu0 0
      %1517 = vmatprep.subr.bf16.mxu0 0
      %1518 = vmatpush1.bf16.msra.mxu0 0
      %1519 = vmatprep.mubr.bf16.mxu0 0
      %1520 = vmatmul.mubr.bf16.gmra.mrb[0].mxu0 %v1485
      %v1521 = vpop.f32.mrb[0].mxu0
      %v1522 = vadd.f32 %v157, %v1521
      %v1523 = vpop.f32.mrb[0].mxu0
      %v1524 = vpop.f32.mrb[0].mxu0
      %v1525 = vadd.f32 %v157, %v1524
      %v1526 = vpop.f32.mrb[0].mxu0
      %1527 = vdwg.mxu0
      %v1528 = vadd.f32 %v1385, %v1522
      %v1529 = vadd.f32 %v1386, %v1525
      %v1530 = vsel %vm212, %v1528, 0.0
      %1531 = vadd.xlane.f32.xlu0 %v1530
      %v1532 = vpop.xlane.xlu0 %1531
      %v1533 = vsel %vm212, %v1529, 0.0
      %1534 = vadd.xlane.f32.xlu0 %v1533
      %v1535 = vpop.xlane.xlu0 %1534
      %v1536 = vmul.f32 %v1532, %v1362
      %v1537 = vmul.f32 %v1535, %v1362
      %v1538 = vsub.f32 %v1528, %v1536
      %v1539 = vsub.f32 %v1529, %v1537
      %v1540 = vmul.f32 %v1538, %v1538
      %v1541 = vmul.f32 %v1539, %v1539
      %v1542 = vsel %vm212, %v1540, 0.0
      %1543 = vadd.xlane.f32.xlu0 %v1542
      %v1544 = vpop.xlane.xlu0 %1543
      %v1545 = vsel %vm212, %v1541, 0.0
      %1546 = vadd.xlane.f32.xlu0 %v1545
      %v1547 = vpop.xlane.xlu0 %1546
      %v1548 = vmul.f32 %v1544, %v1362
      %v1549 = vmul.f32 %v1547, %v1362
      %v1550 = vadd.f32 %v1548, 1e-05
      %v1551 = vadd.f32 %v1549, 1e-05
      %v1552 = vrsqrt.pop %v1550
      %v1553 = vrsqrt.pop %v1551
      %v1554 = vmul.f32 %v1538, %v1552
      %v1555 = vmul.f32 %v1539, %v1553
      %v1556 = vmul.f32 %v1554, %v178
      %v1557 = vmul.f32 %v1555, %v178
      %v1558 = vadd.f32 %v1556, %v185
      %v1559 = vadd.f32 %v1557, %v185
    $region90: #{tpu_custom_call.1} parent=1 // loop_footer
      %s192 = sadd.s32 1, %s188
    $region91: #{tpu_custom_call.1} parent=1 // loop_footer_branch
      %187 = sbr.rel target = $region87
    $region92: #{tpu_custom_call.1} parent=1 // loop_exit
      _
    %vm1560 = vcmask 261120
    %1561 = vst.msk [vmem:[#allocation10] sm:$0xff] %vm1560, %v193
    %1562 = vst.msk [vmem:[#allocation10 + $0x8] sm:$0xff] %vm1560, %v194
    // Predicated region
    $region93: #{tpu_custom_call.1} parent=1 // pred_check
      _
    $region94: #{tpu_custom_call.1} parent=1 // pred_check_branch
      %1564 = sbr.rel (0) target = $region96
    $region95: #{tpu_custom_call.1} parent=1 // pred_region
      %s1566 = ssub.s32 256, 256
      %1567 = vsyncadd [#allocation4], %s1566
      %s1568 = sshll.u32 [#allocation10], 4
      %s1569 = int_to_ptr.vmem [resolvable:$true] %s1568
      %1574 = dma.vmem_to_hbm [thread:$0]  %s1569, 256, %s17, [#allocation4], 128, 128, 8
    $region96: #{tpu_custom_call.1} parent=1 // pred_fallthru
      _
    // Predicated region
    $region97: #{tpu_custom_call.1} parent=1 // pred_check
      _
    $region98: #{tpu_custom_call.1} parent=1 // pred_check_branch
      %1576 = sbr.rel (0) target = $region100
    $region99: #{tpu_custom_call.1} parent=1 // pred_region
      %1577 = dma.done [#allocation4], 256
    $region100: #{tpu_custom_call.1} parent=1 // pred_fallthru
      _
    %1578 = vsyncpa [#allocation3], 1
    %1579 = vsyncpa [#allocation6], 1
    %1580 = vsyncpa [#allocation9], 1
    %1581 = vsyncpa [#allocation4], 1

</llo_original>
